<compile_context>
chip_gen: v7x
topology: tpu7x:2x2x1
jax: 0.10.0
libtpu: 0.0.40
codegen_flags: <defaults>
</compile_context>

<pallas_src>
import jax
import jax.numpy as jnp
from jax.experimental import pallas as pl
from jax.experimental.pallas import tpu as pltpu


def _round_up(n, m):
    return m * ((n + m - 1) // m)


# ----------------------------------------------------------------------------
# Fused kernel: scatter_softmax + scatter_add + AttentionScorer + thresholds.
# ----------------------------------------------------------------------------
def _retriever_fused_kernel(seg_ref, thr_rel_ref, thr_n_ref,
                            rel_ref, cnt_ref, start_rel_ref,
                            start_n_ref, prompt_n_ref, neigh_ref,
                            w_ref, bias_ref,
                            agg_ref, alpha_ref, score_ref,
                            cflag_ref, chosen_ref):
    R, D = rel_ref.shape           # relations x embedding dim
    N = agg_ref.shape[0]           # neighbors (segments)
    RP = seg_ref.shape[1]          # relation lane width (padded to mult of 128)
    NP = score_ref.shape[1]        # neighbor lane width (padded to mult of 128)
    neg_big = jnp.float32(-1e30)

    # ---- relation features & per-relation logits (VPU + lane reduce) -------
    rel = rel_ref[...] * cnt_ref[...]                                   # [R, D]
    logit_col = jnp.sum(start_rel_ref[...] * rel, axis=1, keepdims=True)  # [R, 1]

    # Spread per-relation scalars onto the lane axis (no transpose/reshape):
    # eq_r[r, l] = (r == l); sum over sublanes picks out the diagonal.
    eq_r = (jax.lax.broadcasted_iota(jnp.int32, (R, RP), 0)
            == jax.lax.broadcasted_iota(jnp.int32, (R, RP), 1))
    logit_row = jnp.sum(jnp.where(eq_r, logit_col, 0.0),
                        axis=0, keepdims=True)                          # [1, RP]

    # ---- scatter_softmax entirely on VPU/XLU (no tiny MXU contractions) ----
    seg = seg_ref[...]                                                  # [1, RP]
    onehot = (jax.lax.broadcasted_iota(jnp.int32, (N, RP), 0) == seg)   # [N, RP]
    valid = (seg >= 0) & (seg < N)                                      # [1, RP]

    masked_logit = jnp.where(onehot, logit_row, neg_big)                # [N, RP]
    seg_max = jnp.max(masked_logit, axis=1, keepdims=True)              # [N, 1]
    row_max = jnp.sum(jnp.where(onehot, seg_max, 0.0),
                      axis=0, keepdims=True)                            # [1, RP]
    e_row = jnp.exp(logit_row - row_max)                                # [1, RP]
    seg_den = jnp.sum(jnp.where(onehot, e_row, 0.0),
                      axis=1, keepdims=True)                            # [N, 1]
    den_row = jnp.sum(jnp.where(onehot, seg_den, 0.0),
                      axis=0, keepdims=True)                            # [1, RP]
    den_safe = jnp.where(valid, den_row, 1.0)
    alpha_row = jnp.where(valid, e_row / den_safe, 0.0)                 # [1, RP]

    alpha_ref[...] = alpha_row                                          # lane-dense
    cflag_ref[...] = (alpha_row > thr_rel_ref[...]).astype(jnp.int32)

    # ---- scatter_add(alpha * rel) as one lane-dense MXU matmul -------------
    # Exact 0/1 one-hot LHS, weighted relations on the RHS (same proven
    # orientation as the reference scatter formulation).
    alpha_col = jnp.sum(jnp.where(eq_r, alpha_row, 0.0),
                        axis=1, keepdims=True)                          # [R, 1]
    onehot_f = onehot.astype(jnp.float32)[:, :R]                        # [N, R]
    rel_agg = jax.lax.dot_general(
        onehot_f, alpha_col * rel, (((1,), (0,)), ((), ())),
        preferred_element_type=jnp.float32)                             # [N, D]
    agg_ref[...] = rel_agg

    # ---- AttentionScorer: Linear(4*D -> 1) on bf16-rounded inputs ----------
    # VPU multiply + lane reduce (4*D wide contraction to a single scalar per
    # row is a terrible MXU shape); f32 accumulation, bf16 rounding in-kernel.
    def bf(x):
        return x.astype(jnp.bfloat16).astype(jnp.float32)

    w = w_ref[...]                                                      # [4, D]
    s_col = jnp.sum(bf(start_n_ref[...]) * bf(w[0:1, :]), axis=1, keepdims=True)
    s_col += jnp.sum(bf(prompt_n_ref[...]) * bf(w[1:2, :]), axis=1, keepdims=True)
    s_col += jnp.sum(bf(rel_agg) * bf(w[2:3, :]), axis=1, keepdims=True)
    s_col += jnp.sum(bf(neigh_ref[...]) * bf(w[3:4, :]), axis=1, keepdims=True)  # [N, 1]

    eq_n = (jax.lax.broadcasted_iota(jnp.int32, (N, NP), 0)
            == jax.lax.broadcasted_iota(jnp.int32, (N, NP), 1))
    score_row = jnp.sum(jnp.where(eq_n, s_col, 0.0),
                        axis=0, keepdims=True) + bias_ref[...]          # [1, NP]

    score_ref[...] = score_row                                          # lane-dense
    chosen_ref[...] = (score_row > thr_n_ref[...]).astype(jnp.int32)


def fused_retriever_call(segment_ids, relation_emb, count_emb, start_emb_rel,
                         start_emb_n, prompt_emb_n, neighbor_emb,
                         w4, bias, thr_rel, thr_n):
    """Single fused pallas_call: relation attention + scorer + thresholds."""
    R, D = relation_emb.shape
    N = neighbor_emb.shape[0]
    RP = _round_up(R, 128)
    NP = _round_up(N, 128)

    # Tiny (few-hundred-byte) lane-padded control vectors; the big [*, D]
    # operands are passed untouched (no wrapper cast/pad copies).
    seg_pad = jnp.pad(segment_ids.reshape(1, R).astype(jnp.int32),
                      ((0, 0), (0, RP - R)), constant_values=-1)
    thr_rel_pad = jnp.pad(thr_rel.reshape(1, R).astype(jnp.float32),
                          ((0, 0), (0, RP - R)), constant_values=jnp.inf)
    thr_n_pad = jnp.pad(thr_n.reshape(1, N).astype(jnp.float32),
                        ((0, 0), (0, NP - N)), constant_values=jnp.inf)

    out_shapes = (
        jax.ShapeDtypeStruct((N, D), jnp.float32),    # rel_agg
        jax.ShapeDtypeStruct((1, RP), jnp.float32),   # alpha      (lane-dense)
        jax.ShapeDtypeStruct((1, NP), jnp.float32),   # score      (lane-dense)
        jax.ShapeDtypeStruct((1, RP), jnp.int32),     # chosen_flag
        jax.ShapeDtypeStruct((1, NP), jnp.int32),     # chosen
    )
    agg, alpha_p, score_p, cflag_p, chosen_p = pl.pallas_call(
        _retriever_fused_kernel,
        out_shape=out_shapes,
        compiler_params=pltpu.CompilerParams(
            vmem_limit_bytes=32 * 1024 * 1024),
    )(seg_pad, thr_rel_pad, thr_n_pad,
      relation_emb.astype(jnp.float32),
      count_emb.astype(jnp.float32),
      start_emb_rel.astype(jnp.float32),
      start_emb_n.astype(jnp.float32),
      prompt_emb_n.astype(jnp.float32),
      neighbor_emb.astype(jnp.float32),
      w4.astype(jnp.float32),
      jnp.asarray(bias, jnp.float32).reshape(1, 1))

    alpha = alpha_p[0, :R]
    score = score_p[0, :N]
    chosen_flag = cflag_p[0, :R].astype(jnp.bool_)
    chosen = chosen_p[0, :N].astype(jnp.bool_)
    return agg, alpha, score, chosen_flag, chosen


# ----------------------------------------------------------------------------
# Forward wrapper: dense part of Retriever.forward().
# ----------------------------------------------------------------------------
@jax.jit
def retriever_forward(prompt_emb_b, start_emb_b, task_emb_b, relation_emb,
                      neighbor_emb, count_table, counts, neighbor_idx_rel,
                      start_idx_n, start_idx_rel, w_flat, bias,
                      thr_scores_n, thr_scores_rel):
    D = relation_emb.shape[1]

    # Plain-JAX glue: tiny embedding-table / index gathers (left to XLA,
    # fused under jit with the kernel inputs).
    count_emb = jnp.take(count_table, counts, axis=0)            # count_embs(counts)
    start_emb_rel = jnp.take(start_emb_b, start_idx_rel, axis=0)
    start_emb_n = jnp.take(start_emb_b, start_idx_n, axis=0)
    prompt_emb_n = jnp.take(prompt_emb_b, start_idx_n, axis=0)
    _task_emb_n = jnp.take(task_emb_b, start_idx_n, axis=0)       # gathered but unused by the scorer, as in the module

    w4 = w_flat.reshape(4, D)
    rel_agg, alpha, score, chosen_flag, chosen = fused_retriever_call(
        neighbor_idx_rel, relation_emb, count_emb, start_emb_rel,
        start_emb_n, prompt_emb_n, neighbor_emb, w4, bias,
        thr_scores_rel, thr_scores_n)

    # TODO(synk): the string-valued chosen_triplets / prompt_indices filtering
    #             is Python bookkeeping; we return the masks instead.
    return alpha, rel_agg, score, chosen_flag, chosen


if __name__ == "__main__":
    key = jax.random.PRNGKey(0)
    ks = jax.random.split(key, 8)

    B = 2            # batch items (prompt, start_entity, task)
    D = 768          # sentence-BERT embedding dim
    NEIGH_PER = 8    # neighbors kept per start entity (module caps at 20)
    REL_PER = 4      # relations kept per neighbor     (module caps at 20)
    N = B * NEIGH_PER            # 16 batched neighbors
    R = N * REL_PER              # 64 batched relations
    COUNT_VOCAB = 1000           # TODO(synk): module uses nn.Embedding(10000, 768)
    thresh_neighbor = 1.2
    thresh_relation = 1.2

    # Index bookkeeping the PyTorch code builds by walking the graph.
    batched_start_indices = jnp.repeat(jnp.arange(B, dtype=jnp.int32), NEIGH_PER)  # [N]
    neighbor_indices_rel = jnp.repeat(jnp.arange(N, dtype=jnp.int32), REL_PER)     # [R]
    batched_start_indices_rel = batched_start_indices[neighbor_indices_rel]        # [R]
    batched_thr_scores = jnp.full((N,), thresh_neighbor / (NEIGH_PER + 1e-9), jnp.float32)
    neighbor_thr_scores = jnp.full((R,), thresh_relation / (REL_PER + 1e-9), jnp.float32)

    # Synthetic embeddings standing in for self.encode(...) / torch.randn(768).
    prompt_emb_b = jax.random.normal(ks[0], (B, D), jnp.float32)
    start_emb_b = jax.random.normal(ks[1], (B, D), jnp.float32)
    task_emb_b = jax.random.normal(ks[2], (B, D), jnp.float32)
    relation_emb = jax.random.normal(ks[3], (R, D), jnp.float32)
    neighbor_emb = jax.random.normal(ks[4], (N, D), jnp.float32)
    count_table = jax.random.normal(ks[5], (COUNT_VOCAB, D), jnp.float32)
    counts = jax.random.randint(ks[6], (R,), 0, COUNT_VOCAB, dtype=jnp.int32)

    # AttentionScorer parameters: nn.Linear(4*D, 1).
    w_flat = jax.random.normal(ks[7], (4 * D,), jnp.float32) * 0.02
    bias = jnp.float32(0.01)

    out = retriever_forward(
        prompt_emb_b, start_emb_b, task_emb_b, relation_emb, neighbor_emb,
        count_table, counts, neighbor_indices_rel, batched_start_indices,
        batched_start_indices_rel, w_flat, bias,
        batched_thr_scores, neighbor_thr_scores)
    jax.block_until_ready(out)
    alpha, rel_agg, score, chosen_flag, chosen = out

    # ----------------------- plain-JAX reference check ----------------------
    seg = neighbor_indices_rel
    ref_rel = relation_emb * count_table[counts]
    ref_logit = jnp.sum(start_emb_b[batched_start_indices_rel] * ref_rel, axis=1)
    seg_max = jax.ops.segment_max(ref_logit, seg, num_segments=N)
    e = jnp.exp(ref_logit - seg_max[seg])
    denom = jax.ops.segment_sum(e, seg, num_segments=N)
    ref_alpha = e / denom[seg]
    ref_agg = jax.ops.segment_sum(ref_rel * ref_alpha[:, None], seg, num_segments=N)

    start_n = start_emb_b[batched_start_indices]
    prompt_n = prompt_emb_b[batched_start_indices]
    combined = jnp.concatenate([start_n, prompt_n, ref_agg, neighbor_emb], axis=1)
    combined = combined.astype(jnp.bfloat16).astype(jnp.float32)
    w_bf = w_flat.astype(jnp.bfloat16).astype(jnp.float32)
    ref_score = combined @ w_bf + bias

    assert jnp.allclose(alpha, ref_alpha, atol=2e-3, rtol=2e-3)
    assert jnp.allclose(rel_agg, ref_agg, atol=2e-3, rtol=2e-3)
    assert jnp.allclose(score, ref_score, atol=5e-2, rtol=5e-2)
    assert chosen_flag.shape == (R,) and chosen.shape == (N,)

    print("KERNEL_OK")
</pallas_src>

<mosaic_0001>
module attributes {stable_mosaic.version = 11 : i64} {
  func.func @_retriever_fused_kernel(%arg0: memref<1x128xi32, #tpu.memory_space<vmem>>, %arg1: memref<1x128xf32, #tpu.memory_space<vmem>>, %arg2: memref<1x128xf32, #tpu.memory_space<vmem>>, %arg3: memref<64x768xf32, #tpu.memory_space<vmem>>, %arg4: memref<64x768xf32, #tpu.memory_space<vmem>>, %arg5: memref<64x768xf32, #tpu.memory_space<vmem>>, %arg6: memref<16x768xf32, #tpu.memory_space<vmem>>, %arg7: memref<16x768xf32, #tpu.memory_space<vmem>>, %arg8: memref<16x768xf32, #tpu.memory_space<vmem>>, %arg9: memref<4x768xf32, #tpu.memory_space<vmem>>, %arg10: memref<1x1xf32, #tpu.memory_space<vmem>>, %arg11: memref<16x768xf32, #tpu.memory_space<vmem>>, %arg12: memref<1x128xf32, #tpu.memory_space<vmem>>, %arg13: memref<1x128xf32, #tpu.memory_space<vmem>>, %arg14: memref<1x128xi32, #tpu.memory_space<vmem>>, %arg15: memref<1x128xi32, #tpu.memory_space<vmem>>) attributes {dimension_semantics = [], scalar_prefetch = 0 : i64, scratch_operands = 0 : i64, tpu.core_type = #tpu.core_type<tc>} {
    %c0 = arith.constant 0 : index
    %c0_0 = arith.constant 0 : index
    %0 = vector.load %arg3[%c0, %c0_0] : memref<64x768xf32, #tpu.memory_space<vmem>>, vector<64x768xf32>
    %c0_1 = arith.constant 0 : index
    %c0_2 = arith.constant 0 : index
    %1 = vector.load %arg4[%c0_1, %c0_2] : memref<64x768xf32, #tpu.memory_space<vmem>>, vector<64x768xf32>
    %2 = arith.mulf %0, %1 : vector<64x768xf32>
    %c0_3 = arith.constant 0 : index
    %c0_4 = arith.constant 0 : index
    %3 = vector.load %arg5[%c0_3, %c0_4] : memref<64x768xf32, #tpu.memory_space<vmem>>, vector<64x768xf32>
    %4 = arith.mulf %3, %2 : vector<64x768xf32>
    %cst = arith.constant dense<0.000000e+00> : vector<64xf32>
    %5 = vector.multi_reduction <add>, %4, %cst [1] : vector<64x768xf32> to vector<64xf32>
    %6 = vector.shape_cast %5 : vector<64xf32> to vector<64x1xf32>
    %7 = tpu.iota {dimensions = array<i32: 0>} : vector<64x128xi32>
    %8 = tpu.iota {dimensions = array<i32: 1>} : vector<64x128xi32>
    %9 = arith.cmpi eq, %7, %8 : vector<64x128xi32>
    %cst_5 = arith.constant 0.000000e+00 : f32
    %10 = vector.shape_cast %6 : vector<64x1xf32> to vector<64x1xf32>
    %11 = vector.broadcast %10 : vector<64x1xf32> to vector<64x128xf32>
    %12 = vector.broadcast %cst_5 : f32 to vector<64x128xf32>
    %13 = arith.select %9, %11, %12 : vector<64x128xi1>, vector<64x128xf32>
    %cst_6 = arith.constant dense<0.000000e+00> : vector<128xf32>
    %14 = vector.multi_reduction <add>, %13, %cst_6 [0] : vector<64x128xf32> to vector<128xf32>
    %15 = vector.shape_cast %14 : vector<128xf32> to vector<1x128xf32>
    %c0_7 = arith.constant 0 : index
    %c0_8 = arith.constant 0 : index
    %16 = vector.load %arg0[%c0_7, %c0_8] : memref<1x128xi32, #tpu.memory_space<vmem>>, vector<1x128xi32>
    %17 = tpu.iota {dimensions = array<i32: 0>} : vector<16x128xi32>
    %18 = vector.broadcast %16 : vector<1x128xi32> to vector<16x128xi32>
    %19 = arith.cmpi eq, %17, %18 : vector<16x128xi32>
    %c0_i32 = arith.constant 0 : i32
    %20 = vector.broadcast %c0_i32 : i32 to vector<1x128xi32>
    %21 = arith.cmpi sge, %16, %20 : vector<1x128xi32>
    %c16_i32 = arith.constant 16 : i32
    %22 = vector.broadcast %c16_i32 : i32 to vector<1x128xi32>
    %23 = arith.cmpi slt, %16, %22 : vector<1x128xi32>
    %24 = arith.andi %21, %23 : vector<1x128xi1>
    %cst_9 = arith.constant -1.000000e+30 : f32
    %25 = vector.shape_cast %15 : vector<1x128xf32> to vector<1x128xf32>
    %26 = vector.broadcast %25 : vector<1x128xf32> to vector<16x128xf32>
    %27 = vector.broadcast %cst_9 : f32 to vector<16x128xf32>
    %28 = arith.select %19, %26, %27 : vector<16x128xi1>, vector<16x128xf32>
    %cst_10 = arith.constant dense<0xFF800000> : vector<16xf32>
    %29 = vector.multi_reduction <maximumf>, %28, %cst_10 [1] : vector<16x128xf32> to vector<16xf32>
    %30 = vector.shape_cast %29 : vector<16xf32> to vector<16x1xf32>
    %cst_11 = arith.constant 0.000000e+00 : f32
    %31 = vector.shape_cast %30 : vector<16x1xf32> to vector<16x1xf32>
    %32 = vector.broadcast %31 : vector<16x1xf32> to vector<16x128xf32>
    %33 = vector.broadcast %cst_11 : f32 to vector<16x128xf32>
    %34 = arith.select %19, %32, %33 : vector<16x128xi1>, vector<16x128xf32>
    %cst_12 = arith.constant dense<0.000000e+00> : vector<128xf32>
    %35 = vector.multi_reduction <add>, %34, %cst_12 [0] : vector<16x128xf32> to vector<128xf32>
    %36 = vector.shape_cast %35 : vector<128xf32> to vector<1x128xf32>
    %37 = arith.subf %15, %36 : vector<1x128xf32>
    %38 = math.exp %37 : vector<1x128xf32>
    %cst_13 = arith.constant 0.000000e+00 : f32
    %39 = vector.shape_cast %38 : vector<1x128xf32> to vector<1x128xf32>
    %40 = vector.broadcast %39 : vector<1x128xf32> to vector<16x128xf32>
    %41 = vector.broadcast %cst_13 : f32 to vector<16x128xf32>
    %42 = arith.select %19, %40, %41 : vector<16x128xi1>, vector<16x128xf32>
    %cst_14 = arith.constant dense<0.000000e+00> : vector<16xf32>
    %43 = vector.multi_reduction <add>, %42, %cst_14 [1] : vector<16x128xf32> to vector<16xf32>
    %44 = vector.shape_cast %43 : vector<16xf32> to vector<16x1xf32>
    %cst_15 = arith.constant 0.000000e+00 : f32
    %45 = vector.shape_cast %44 : vector<16x1xf32> to vector<16x1xf32>
    %46 = vector.broadcast %45 : vector<16x1xf32> to vector<16x128xf32>
    %47 = vector.broadcast %cst_15 : f32 to vector<16x128xf32>
    %48 = arith.select %19, %46, %47 : vector<16x128xi1>, vector<16x128xf32>
    %cst_16 = arith.constant dense<0.000000e+00> : vector<128xf32>
    %49 = vector.multi_reduction <add>, %48, %cst_16 [0] : vector<16x128xf32> to vector<128xf32>
    %50 = vector.shape_cast %49 : vector<128xf32> to vector<1x128xf32>
    %cst_17 = arith.constant 1.000000e+00 : f32
    %51 = vector.broadcast %cst_17 : f32 to vector<1x128xf32>
    %52 = arith.select %24, %50, %51 : vector<1x128xi1>, vector<1x128xf32>
    %53 = arith.divf %38, %52 : vector<1x128xf32>
    %cst_18 = arith.constant 0.000000e+00 : f32
    %54 = vector.broadcast %cst_18 : f32 to vector<1x128xf32>
    %55 = arith.select %24, %53, %54 : vector<1x128xi1>, vector<1x128xf32>
    %c0_19 = arith.constant 0 : index
    %c0_20 = arith.constant 0 : index
    %56 = vector.load %arg12[%c0_19, %c0_20] : memref<1x128xf32, #tpu.memory_space<vmem>>, vector<1x128xf32>
    tpu.vector_store %arg12[%c0_19, %c0_20], %55 {strides = array<i32>} : memref<1x128xf32, #tpu.memory_space<vmem>>, vector<1x128xf32>,
    %c0_21 = arith.constant 0 : index
    %c0_22 = arith.constant 0 : index
    %57 = vector.load %arg1[%c0_21, %c0_22] : memref<1x128xf32, #tpu.memory_space<vmem>>, vector<1x128xf32>
    %58 = arith.cmpf ogt, %55, %57 : vector<1x128xf32>
    %59 = arith.extui %58 : vector<1x128xi1> to vector<1x128xi32>
    %c0_23 = arith.constant 0 : index
    %c0_24 = arith.constant 0 : index
    %60 = vector.load %arg14[%c0_23, %c0_24] : memref<1x128xi32, #tpu.memory_space<vmem>>, vector<1x128xi32>
    tpu.vector_store %arg14[%c0_23, %c0_24], %59 {strides = array<i32>} : memref<1x128xi32, #tpu.memory_space<vmem>>, vector<1x128xi32>,
    %cst_25 = arith.constant 0.000000e+00 : f32
    %61 = vector.shape_cast %55 : vector<1x128xf32> to vector<1x128xf32>
    %62 = vector.broadcast %61 : vector<1x128xf32> to vector<64x128xf32>
    %63 = vector.broadcast %cst_25 : f32 to vector<64x128xf32>
    %64 = arith.select %9, %62, %63 : vector<64x128xi1>, vector<64x128xf32>
    %cst_26 = arith.constant dense<0.000000e+00> : vector<64xf32>
    %65 = vector.multi_reduction <add>, %64, %cst_26 [1] : vector<64x128xf32> to vector<64xf32>
    %66 = vector.shape_cast %65 : vector<64xf32> to vector<64x1xf32>
    %67 = arith.extui %19 : vector<16x128xi1> to vector<16x128xi32>
    %68 = arith.sitofp %67 : vector<16x128xi32> to vector<16x128xf32>
    %69 = vector.extract_strided_slice %68 {offsets = [0, 0], sizes = [16, 64], strides = [1, 1]} : vector<16x128xf32> to vector<16x64xf32>
    %70 = vector.broadcast %66 : vector<64x1xf32> to vector<64x768xf32>
    %71 = arith.mulf %70, %2 : vector<64x768xf32>
    %cst_27 = arith.constant dense<0.000000e+00> : vector<16x768xf32>
    %72 = tpu.matmul %69, %71, %cst_27 {dimension_numbers = #tpu.dot_dimension_numbers<[1], [0], [0], [1], [0, 0, 1, 1], [], []>} : vector<16x64xf32>, vector<64x768xf32>, vector<16x768xf32> -> vector<16x768xf32>
    %c0_28 = arith.constant 0 : index
    %c0_29 = arith.constant 0 : index
    %73 = vector.load %arg11[%c0_28, %c0_29] : memref<16x768xf32, #tpu.memory_space<vmem>>, vector<16x768xf32>
    tpu.vector_store %arg11[%c0_28, %c0_29], %72 {strides = array<i32>} : memref<16x768xf32, #tpu.memory_space<vmem>>, vector<16x768xf32>,
    %c0_30 = arith.constant 0 : index
    %c0_31 = arith.constant 0 : index
    %74 = vector.load %arg9[%c0_30, %c0_31] : memref<4x768xf32, #tpu.memory_space<vmem>>, vector<4x768xf32>
    %c0_32 = arith.constant 0 : index
    %c0_33 = arith.constant 0 : index
    %75 = vector.load %arg6[%c0_32, %c0_33] : memref<16x768xf32, #tpu.memory_space<vmem>>, vector<16x768xf32>
    %76 = arith.truncf %75 : vector<16x768xf32> to vector<16x768xbf16>
    %77 = arith.extf %76 : vector<16x768xbf16> to vector<16x768xf32>
    %78 = vector.extract_strided_slice %74 {offsets = [0, 0], sizes = [1, 768], strides = [1, 1]} : vector<4x768xf32> to vector<1x768xf32>
    %79 = arith.truncf %78 : vector<1x768xf32> to vector<1x768xbf16>
    %80 = arith.extf %79 : vector<1x768xbf16> to vector<1x768xf32>
    %81 = vector.broadcast %80 : vector<1x768xf32> to vector<16x768xf32>
    %82 = arith.mulf %77, %81 : vector<16x768xf32>
    %cst_34 = arith.constant dense<0.000000e+00> : vector<16xf32>
    %83 = vector.multi_reduction <add>, %82, %cst_34 [1] : vector<16x768xf32> to vector<16xf32>
    %84 = vector.shape_cast %83 : vector<16xf32> to vector<16x1xf32>
    %c0_35 = arith.constant 0 : index
    %c0_36 = arith.constant 0 : index
    %85 = vector.load %arg7[%c0_35, %c0_36] : memref<16x768xf32, #tpu.memory_space<vmem>>, vector<16x768xf32>
    %86 = arith.truncf %85 : vector<16x768xf32> to vector<16x768xbf16>
    %87 = arith.extf %86 : vector<16x768xbf16> to vector<16x768xf32>
    %88 = vector.extract_strided_slice %74 {offsets = [1, 0], sizes = [1, 768], strides = [1, 1]} : vector<4x768xf32> to vector<1x768xf32>
    %89 = arith.truncf %88 : vector<1x768xf32> to vector<1x768xbf16>
    %90 = arith.extf %89 : vector<1x768xbf16> to vector<1x768xf32>
    %91 = vector.broadcast %90 : vector<1x768xf32> to vector<16x768xf32>
    %92 = arith.mulf %87, %91 : vector<16x768xf32>
    %cst_37 = arith.constant dense<0.000000e+00> : vector<16xf32>
    %93 = vector.multi_reduction <add>, %92, %cst_37 [1] : vector<16x768xf32> to vector<16xf32>
    %94 = vector.shape_cast %93 : vector<16xf32> to vector<16x1xf32>
    %95 = arith.addf %84, %94 : vector<16x1xf32>
    %96 = arith.truncf %72 : vector<16x768xf32> to vector<16x768xbf16>
    %97 = arith.extf %96 : vector<16x768xbf16> to vector<16x768xf32>
    %98 = vector.extract_strided_slice %74 {offsets = [2, 0], sizes = [1, 768], strides = [1, 1]} : vector<4x768xf32> to vector<1x768xf32>
    %99 = arith.truncf %98 : vector<1x768xf32> to vector<1x768xbf16>
    %100 = arith.extf %99 : vector<1x768xbf16> to vector<1x768xf32>
    %101 = vector.broadcast %100 : vector<1x768xf32> to vector<16x768xf32>
    %102 = arith.mulf %97, %101 : vector<16x768xf32>
    %cst_38 = arith.constant dense<0.000000e+00> : vector<16xf32>
    %103 = vector.multi_reduction <add>, %102, %cst_38 [1] : vector<16x768xf32> to vector<16xf32>
    %104 = vector.shape_cast %103 : vector<16xf32> to vector<16x1xf32>
    %105 = arith.addf %95, %104 : vector<16x1xf32>
    %c0_39 = arith.constant 0 : index
    %c0_40 = arith.constant 0 : index
    %106 = vector.load %arg8[%c0_39, %c0_40] : memref<16x768xf32, #tpu.memory_space<vmem>>, vector<16x768xf32>
    %107 = arith.truncf %106 : vector<16x768xf32> to vector<16x768xbf16>
    %108 = arith.extf %107 : vector<16x768xbf16> to vector<16x768xf32>
    %109 = vector.extract_strided_slice %74 {offsets = [3, 0], sizes = [1, 768], strides = [1, 1]} : vector<4x768xf32> to vector<1x768xf32>
    %110 = arith.truncf %109 : vector<1x768xf32> to vector<1x768xbf16>
    %111 = arith.extf %110 : vector<1x768xbf16> to vector<1x768xf32>
    %112 = vector.broadcast %111 : vector<1x768xf32> to vector<16x768xf32>
    %113 = arith.mulf %108, %112 : vector<16x768xf32>
    %cst_41 = arith.constant dense<0.000000e+00> : vector<16xf32>
    %114 = vector.multi_reduction <add>, %113, %cst_41 [1] : vector<16x768xf32> to vector<16xf32>
    %115 = vector.shape_cast %114 : vector<16xf32> to vector<16x1xf32>
    %116 = arith.addf %105, %115 : vector<16x1xf32>
    %117 = tpu.iota {dimensions = array<i32: 0>} : vector<16x128xi32>
    %118 = tpu.iota {dimensions = array<i32: 1>} : vector<16x128xi32>
    %119 = arith.cmpi eq, %117, %118 : vector<16x128xi32>
    %cst_42 = arith.constant 0.000000e+00 : f32
    %120 = vector.shape_cast %116 : vector<16x1xf32> to vector<16x1xf32>
    %121 = vector.broadcast %120 : vector<16x1xf32> to vector<16x128xf32>
    %122 = vector.broadcast %cst_42 : f32 to vector<16x128xf32>
    %123 = arith.select %119, %121, %122 : vector<16x128xi1>, vector<16x128xf32>
    %cst_43 = arith.constant dense<0.000000e+00> : vector<128xf32>
    %124 = vector.multi_reduction <add>, %123, %cst_43 [0] : vector<16x128xf32> to vector<128xf32>
    %125 = vector.shape_cast %124 : vector<128xf32> to vector<1x128xf32>
    %c0_44 = arith.constant 0 : index
    %c0_45 = arith.constant 0 : index
    %126 = vector.load %arg10[%c0_44, %c0_45] : memref<1x1xf32, #tpu.memory_space<vmem>>, vector<1x1xf32>
    %127 = vector.broadcast %126 : vector<1x1xf32> to vector<1x128xf32>
    %128 = arith.addf %125, %127 : vector<1x128xf32>
    %c0_46 = arith.constant 0 : index
    %c0_47 = arith.constant 0 : index
    %129 = vector.load %arg13[%c0_46, %c0_47] : memref<1x128xf32, #tpu.memory_space<vmem>>, vector<1x128xf32>
    tpu.vector_store %arg13[%c0_46, %c0_47], %128 {strides = array<i32>} : memref<1x128xf32, #tpu.memory_space<vmem>>, vector<1x128xf32>,
    %c0_48 = arith.constant 0 : index
    %c0_49 = arith.constant 0 : index
    %130 = vector.load %arg2[%c0_48, %c0_49] : memref<1x128xf32, #tpu.memory_space<vmem>>, vector<1x128xf32>
    %131 = arith.cmpf ogt, %128, %130 : vector<1x128xf32>
    %132 = arith.extui %131 : vector<1x128xi1> to vector<1x128xi32>
    %c0_50 = arith.constant 0 : index
    %c0_51 = arith.constant 0 : index
    %133 = vector.load %arg15[%c0_50, %c0_51] : memref<1x128xi32, #tpu.memory_space<vmem>>, vector<1x128xi32>
    tpu.vector_store %arg15[%c0_50, %c0_51], %132 {strides = array<i32>} : memref<1x128xi32, #tpu.memory_space<vmem>>, vector<1x128xi32>,
    return
  }
}

</mosaic_0001>

<llo_original>
// kernel: retriever_forward.1
$region0: #{retriever_forward.1}
  #allocation0 [shape = 'u32[]', space=smem, size = 0x4, offset = 0x4, fixed_abs, tag = 'smem constant byte address 0x4 - core index']
  #allocation1 [shape = 'u32[144,128]{1,0:T(1,128)}', space=vmem, size = 0x12000, scoped, tag = 'internal scratch']
  #allocation2 [shape = 'f32[1,1]{1,0:T(1,128)S(1)}', space=vmem, size = 0x200, scoped, tag = 'scoped memory for retriever_forward.1']
  %s0 = inlined_call_operand.vmem [shape: s32[1,128], index: 0, kind: input, shape index: {}]
  %s1 = inlined_call_operand.vmem [shape: f32[1,128], index: 1, kind: input, shape index: {}]
  %s2 = inlined_call_operand.vmem [shape: f32[1,128], index: 2, kind: input, shape index: {}]
  %s3 = inlined_call_operand.vmem [shape: f32[64,768], index: 3, kind: input, shape index: {}]
  %s4 = inlined_call_operand.vmem [shape: f32[64,768], index: 4, kind: input, shape index: {}]
  %s5 = inlined_call_operand.vmem [shape: f32[64,768], index: 5, kind: input, shape index: {}]
  %s6 = inlined_call_operand.vmem [shape: f32[16,768], index: 6, kind: input, shape index: {}]
  %s7 = inlined_call_operand.vmem [shape: f32[16,768], index: 7, kind: input, shape index: {}]
  %s8 = inlined_call_operand.vmem [shape: f32[16,768], index: 8, kind: input, shape index: {}]
  %s9 = inlined_call_operand.vmem [shape: f32[4,768], index: 9, kind: input, shape index: {}]
  %s10 = inlined_call_operand.<no memory space> [shape: f32[1,1], index: 10, kind: input, shape index: {}]
  %s11 = inlined_call_operand.hbm [shape: f32[16,768], index: 11, kind: output, shape index: {0}]
  %s12 = inlined_call_operand.vmem [shape: f32[1,128], index: 12, kind: output, shape index: {1}]
  %s13 = inlined_call_operand.vmem [shape: f32[1,128], index: 13, kind: output, shape index: {2}]
  %s14 = inlined_call_operand.vmem [shape: s32[1,128], index: 14, kind: output, shape index: {3}]
  %s15 = inlined_call_operand.vmem [shape: s32[1,128], index: 15, kind: output, shape index: {4}]
  %16 = xla_tuple %s11, %s12, %s13, %s14, %s15
  %s17 = sld [smem:[#allocation0]]
  $region86: #{retriever_forward.1} parent=0
    _
  %s19 = ssub.s32 1, %s17
  %s20 = scalar_select 0, %s19, %s17
  %v21 = vstv %s10
  %22 = vst [vmem:[#allocation2] sm:$0x1] %v21
  $region1: #{retriever_forward.1} parent=0
    #allocation3 [shape = 'u8[49152]{0}', space=vmem, size = 0xc000, scoped, tag = 'output window, operand 0, single buffered']
    #allocation4 [shape = 's32[1]{0}', space=sflag, size = 0x4, scoped, tag = 'scoped memory for retriever_forward.1']
    %23 = vsyncpa [#allocation4], 0
    // Predicated region
    $region2: #{retriever_forward.1} parent=1 // pred_check
      _
    $region3: #{retriever_forward.1} parent=1 // pred_check_branch
      %25 = sbr.rel (0) target = $region5
    $region4: #{retriever_forward.1} parent=1 // pred_region
      _
    $region5: #{retriever_forward.1} parent=1 // pred_fallthru
      _
    // Predicated region
    $region6: #{retriever_forward.1} parent=1 // pred_check
      _
    $region7: #{retriever_forward.1} parent=1 // pred_check_branch
      %27 = sbr.rel (0) target = $region9
    $region8: #{retriever_forward.1} parent=1 // pred_region
      _
    $region9: #{retriever_forward.1} parent=1 // pred_fallthru
      _
    // Predicated region
    $region10: #{retriever_forward.1} parent=1 // pred_check
      _
    $region11: #{retriever_forward.1} parent=1 // pred_check_branch
      %29 = sbr.rel (0) target = $region13
    $region12: #{retriever_forward.1} parent=1 // pred_region
      _
    $region13: #{retriever_forward.1} parent=1 // pred_fallthru
      _
    // Predicated region
    $region14: #{retriever_forward.1} parent=1 // pred_check
      _
    $region15: #{retriever_forward.1} parent=1 // pred_check_branch
      %31 = sbr.rel (0) target = $region17
    $region16: #{retriever_forward.1} parent=1 // pred_region
      _
    $region17: #{retriever_forward.1} parent=1 // pred_fallthru
      _
    // Predicated region
    $region18: #{retriever_forward.1} parent=1 // pred_check
      _
    $region19: #{retriever_forward.1} parent=1 // pred_check_branch
      %33 = sbr.rel (0) target = $region21
    $region20: #{retriever_forward.1} parent=1 // pred_region
      _
    $region21: #{retriever_forward.1} parent=1 // pred_fallthru
      _
    // Predicated region
    $region22: #{retriever_forward.1} parent=1 // pred_check
      _
    $region23: #{retriever_forward.1} parent=1 // pred_check_branch
      %35 = sbr.rel (0) target = $region25
    $region24: #{retriever_forward.1} parent=1 // pred_region
      _
    $region25: #{retriever_forward.1} parent=1 // pred_fallthru
      _
    // Predicated region
    $region26: #{retriever_forward.1} parent=1 // pred_check
      _
    $region27: #{retriever_forward.1} parent=1 // pred_check_branch
      %37 = sbr.rel (0) target = $region29
    $region28: #{retriever_forward.1} parent=1 // pred_region
      _
    $region29: #{retriever_forward.1} parent=1 // pred_fallthru
      _
    // Predicated region
    $region30: #{retriever_forward.1} parent=1 // pred_check
      _
    $region31: #{retriever_forward.1} parent=1 // pred_check_branch
      %39 = sbr.rel (0) target = $region33
    $region32: #{retriever_forward.1} parent=1 // pred_region
      _
    $region33: #{retriever_forward.1} parent=1 // pred_fallthru
      _
    // Predicated region
    $region34: #{retriever_forward.1} parent=1 // pred_check
      _
    $region35: #{retriever_forward.1} parent=1 // pred_check_branch
      %41 = sbr.rel (0) target = $region37
    $region36: #{retriever_forward.1} parent=1 // pred_region
      _
    $region37: #{retriever_forward.1} parent=1 // pred_fallthru
      _
    // Predicated region
    $region38: #{retriever_forward.1} parent=1 // pred_check
      _
    $region39: #{retriever_forward.1} parent=1 // pred_check_branch
      %43 = sbr.rel (0) target = $region41
    $region40: #{retriever_forward.1} parent=1 // pred_region
      _
    $region41: #{retriever_forward.1} parent=1 // pred_fallthru
      _
    // Predicated region
    $region42: #{retriever_forward.1} parent=1 // pred_check
      _
    $region43: #{retriever_forward.1} parent=1 // pred_check_branch
      %45 = sbr.rel (0) target = $region45
    $region44: #{retriever_forward.1} parent=1 // pred_region
      _
    $region45: #{retriever_forward.1} parent=1 // pred_fallthru
      _
    %v46 = vld [vmem:[%s3] sm:$0xff]
    %v47 = vld [vmem:[%s3 + $0x8] sm:$0xff]
    %v48 = vld [vmem:[%s3 + $0x10] sm:$0xff]
    %v49 = vld [vmem:[%s3 + $0x18] sm:$0xff]
    %v50 = vld [vmem:[%s3 + $0x20] sm:$0xff]
    %v51 = vld [vmem:[%s3 + $0x28] sm:$0xff]
    %v52 = vld [vmem:[%s3 + $0x30] sm:$0xff]
    %v53 = vld [vmem:[%s3 + $0x38] sm:$0xff]
    %v54 = vld [vmem:[%s3 + $0x40] sm:$0xff]
    %v55 = vld [vmem:[%s3 + $0x48] sm:$0xff]
    %v56 = vld [vmem:[%s3 + $0x50] sm:$0xff]
    %v57 = vld [vmem:[%s3 + $0x58] sm:$0xff]
    %v58 = vld [vmem:[%s3 + $0x60] sm:$0xff]
    %v59 = vld [vmem:[%s3 + $0x68] sm:$0xff]
    %v60 = vld [vmem:[%s3 + $0x70] sm:$0xff]
    %v61 = vld [vmem:[%s3 + $0x78] sm:$0xff]
    %v62 = vld [vmem:[%s3 + $0x80] sm:$0xff]
    %v63 = vld [vmem:[%s3 + $0x88] sm:$0xff]
    %v64 = vld [vmem:[%s3 + $0x90] sm:$0xff]
    %v65 = vld [vmem:[%s3 + $0x98] sm:$0xff]
    %v66 = vld [vmem:[%s3 + $0xa0] sm:$0xff]
    %v67 = vld [vmem:[%s3 + $0xa8] sm:$0xff]
    %v68 = vld [vmem:[%s3 + $0xb0] sm:$0xff]
    %v69 = vld [vmem:[%s3 + $0xb8] sm:$0xff]
    %v70 = vld [vmem:[%s3 + $0xc0] sm:$0xff]
    %v71 = vld [vmem:[%s3 + $0xc8] sm:$0xff]
    %v72 = vld [vmem:[%s3 + $0xd0] sm:$0xff]
    %v73 = vld [vmem:[%s3 + $0xd8] sm:$0xff]
    %v74 = vld [vmem:[%s3 + $0xe0] sm:$0xff]
    %v75 = vld [vmem:[%s3 + $0xe8] sm:$0xff]
    %v76 = vld [vmem:[%s3 + $0xf0] sm:$0xff]
    %v77 = vld [vmem:[%s3 + $0xf8] sm:$0xff]
    %v78 = vld [vmem:[%s3 + $0x100] sm:$0xff]
    %v79 = vld [vmem:[%s3 + $0x108] sm:$0xff]
    %v80 = vld [vmem:[%s3 + $0x110] sm:$0xff]
    %v81 = vld [vmem:[%s3 + $0x118] sm:$0xff]
    %v82 = vld [vmem:[%s3 + $0x120] sm:$0xff]
    %v83 = vld [vmem:[%s3 + $0x128] sm:$0xff]
    %v84 = vld [vmem:[%s3 + $0x130] sm:$0xff]
    %v85 = vld [vmem:[%s3 + $0x138] sm:$0xff]
    %v86 = vld [vmem:[%s3 + $0x140] sm:$0xff]
    %v87 = vld [vmem:[%s3 + $0x148] sm:$0xff]
    %v88 = vld [vmem:[%s3 + $0x150] sm:$0xff]
    %v89 = vld [vmem:[%s3 + $0x158] sm:$0xff]
    %v90 = vld [vmem:[%s3 + $0x160] sm:$0xff]
    %v91 = vld [vmem:[%s3 + $0x168] sm:$0xff]
    %v92 = vld [vmem:[%s3 + $0x170] sm:$0xff]
    %v93 = vld [vmem:[%s3 + $0x178] sm:$0xff]
    %v94 = vld [vmem:[%s4] sm:$0xff]
    %v95 = vld [vmem:[%s4 + $0x8] sm:$0xff]
    %v96 = vld [vmem:[%s4 + $0x10] sm:$0xff]
    %v97 = vld [vmem:[%s4 + $0x18] sm:$0xff]
    %v98 = vld [vmem:[%s4 + $0x20] sm:$0xff]
    %v99 = vld [vmem:[%s4 + $0x28] sm:$0xff]
    %v100 = vld [vmem:[%s4 + $0x30] sm:$0xff]
    %v101 = vld [vmem:[%s4 + $0x38] sm:$0xff]
    %v102 = vld [vmem:[%s4 + $0x40] sm:$0xff]
    %v103 = vld [vmem:[%s4 + $0x48] sm:$0xff]
    %v104 = vld [vmem:[%s4 + $0x50] sm:$0xff]
    %v105 = vld [vmem:[%s4 + $0x58] sm:$0xff]
    %v106 = vld [vmem:[%s4 + $0x60] sm:$0xff]
    %v107 = vld [vmem:[%s4 + $0x68] sm:$0xff]
    %v108 = vld [vmem:[%s4 + $0x70] sm:$0xff]
    %v109 = vld [vmem:[%s4 + $0x78] sm:$0xff]
    %v110 = vld [vmem:[%s4 + $0x80] sm:$0xff]
    %v111 = vld [vmem:[%s4 + $0x88] sm:$0xff]
    %v112 = vld [vmem:[%s4 + $0x90] sm:$0xff]
    %v113 = vld [vmem:[%s4 + $0x98] sm:$0xff]
    %v114 = vld [vmem:[%s4 + $0xa0] sm:$0xff]
    %v115 = vld [vmem:[%s4 + $0xa8] sm:$0xff]
    %v116 = vld [vmem:[%s4 + $0xb0] sm:$0xff]
    %v117 = vld [vmem:[%s4 + $0xb8] sm:$0xff]
    %v118 = vld [vmem:[%s4 + $0xc0] sm:$0xff]
    %v119 = vld [vmem:[%s4 + $0xc8] sm:$0xff]
    %v120 = vld [vmem:[%s4 + $0xd0] sm:$0xff]
    %v121 = vld [vmem:[%s4 + $0xd8] sm:$0xff]
    %v122 = vld [vmem:[%s4 + $0xe0] sm:$0xff]
    %v123 = vld [vmem:[%s4 + $0xe8] sm:$0xff]
    %v124 = vld [vmem:[%s4 + $0xf0] sm:$0xff]
    %v125 = vld [vmem:[%s4 + $0xf8] sm:$0xff]
    %v126 = vld [vmem:[%s4 + $0x100] sm:$0xff]
    %v127 = vld [vmem:[%s4 + $0x108] sm:$0xff]
    %v128 = vld [vmem:[%s4 + $0x110] sm:$0xff]
    %v129 = vld [vmem:[%s4 + $0x118] sm:$0xff]
    %v130 = vld [vmem:[%s4 + $0x120] sm:$0xff]
    %v131 = vld [vmem:[%s4 + $0x128] sm:$0xff]
    %v132 = vld [vmem:[%s4 + $0x130] sm:$0xff]
    %v133 = vld [vmem:[%s4 + $0x138] sm:$0xff]
    %v134 = vld [vmem:[%s4 + $0x140] sm:$0xff]
    %v135 = vld [vmem:[%s4 + $0x148] sm:$0xff]
    %v136 = vld [vmem:[%s4 + $0x150] sm:$0xff]
    %v137 = vld [vmem:[%s4 + $0x158] sm:$0xff]
    %v138 = vld [vmem:[%s4 + $0x160] sm:$0xff]
    %v139 = vld [vmem:[%s4 + $0x168] sm:$0xff]
    %v140 = vld [vmem:[%s4 + $0x170] sm:$0xff]
    %v141 = vld [vmem:[%s4 + $0x178] sm:$0xff]
    %v142 = vmul.f32 %v46, %v94
    %v143 = vmul.f32 %v47, %v95
    %v144 = vmul.f32 %v48, %v96
    %v145 = vmul.f32 %v49, %v97
    %v146 = vmul.f32 %v50, %v98
    %v147 = vmul.f32 %v51, %v99
    %v148 = vmul.f32 %v52, %v100
    %v149 = vmul.f32 %v53, %v101
    %v150 = vmul.f32 %v54, %v102
    %v151 = vmul.f32 %v55, %v103
    %v152 = vmul.f32 %v56, %v104
    %v153 = vmul.f32 %v57, %v105
    %v154 = vmul.f32 %v58, %v106
    %v155 = vmul.f32 %v59, %v107
    %v156 = vmul.f32 %v60, %v108
    %v157 = vmul.f32 %v61, %v109
    %v158 = vmul.f32 %v62, %v110
    %v159 = vmul.f32 %v63, %v111
    %v160 = vmul.f32 %v64, %v112
    %v161 = vmul.f32 %v65, %v113
    %v162 = vmul.f32 %v66, %v114
    %v163 = vmul.f32 %v67, %v115
    %v164 = vmul.f32 %v68, %v116
    %v165 = vmul.f32 %v69, %v117
    %v166 = vmul.f32 %v70, %v118
    %v167 = vmul.f32 %v71, %v119
    %v168 = vmul.f32 %v72, %v120
    %v169 = vmul.f32 %v73, %v121
    %v170 = vmul.f32 %v74, %v122
    %v171 = vmul.f32 %v75, %v123
    %v172 = vmul.f32 %v76, %v124
    %v173 = vmul.f32 %v77, %v125
    %v174 = vmul.f32 %v78, %v126
    %v175 = vmul.f32 %v79, %v127
    %v176 = vmul.f32 %v80, %v128
    %v177 = vmul.f32 %v81, %v129
    %v178 = vmul.f32 %v82, %v130
    %v179 = vmul.f32 %v83, %v131
    %v180 = vmul.f32 %v84, %v132
    %v181 = vmul.f32 %v85, %v133
    %v182 = vmul.f32 %v86, %v134
    %v183 = vmul.f32 %v87, %v135
    %v184 = vmul.f32 %v88, %v136
    %v185 = vmul.f32 %v89, %v137
    %v186 = vmul.f32 %v90, %v138
    %v187 = vmul.f32 %v91, %v139
    %v188 = vmul.f32 %v92, %v140
    %v189 = vmul.f32 %v93, %v141
    %v190 = vld [vmem:[%s5] sm:$0xff]
    %v191 = vld [vmem:[%s5 + $0x8] sm:$0xff]
    %v192 = vld [vmem:[%s5 + $0x10] sm:$0xff]
    %v193 = vld [vmem:[%s5 + $0x18] sm:$0xff]
    %v194 = vld [vmem:[%s5 + $0x20] sm:$0xff]
    %v195 = vld [vmem:[%s5 + $0x28] sm:$0xff]
    %v196 = vld [vmem:[%s5 + $0x30] sm:$0xff]
    %v197 = vld [vmem:[%s5 + $0x38] sm:$0xff]
    %v198 = vld [vmem:[%s5 + $0x40] sm:$0xff]
    %v199 = vld [vmem:[%s5 + $0x48] sm:$0xff]
    %v200 = vld [vmem:[%s5 + $0x50] sm:$0xff]
    %v201 = vld [vmem:[%s5 + $0x58] sm:$0xff]
    %v202 = vld [vmem:[%s5 + $0x60] sm:$0xff]
    %v203 = vld [vmem:[%s5 + $0x68] sm:$0xff]
    %v204 = vld [vmem:[%s5 + $0x70] sm:$0xff]
    %v205 = vld [vmem:[%s5 + $0x78] sm:$0xff]
    %v206 = vld [vmem:[%s5 + $0x80] sm:$0xff]
    %v207 = vld [vmem:[%s5 + $0x88] sm:$0xff]
    %v208 = vld [vmem:[%s5 + $0x90] sm:$0xff]
    %v209 = vld [vmem:[%s5 + $0x98] sm:$0xff]
    %v210 = vld [vmem:[%s5 + $0xa0] sm:$0xff]
    %v211 = vld [vmem:[%s5 + $0xa8] sm:$0xff]
    %v212 = vld [vmem:[%s5 + $0xb0] sm:$0xff]
    %v213 = vld [vmem:[%s5 + $0xb8] sm:$0xff]
    %v214 = vld [vmem:[%s5 + $0xc0] sm:$0xff]
    %v215 = vld [vmem:[%s5 + $0xc8] sm:$0xff]
    %v216 = vld [vmem:[%s5 + $0xd0] sm:$0xff]
    %v217 = vld [vmem:[%s5 + $0xd8] sm:$0xff]
    %v218 = vld [vmem:[%s5 + $0xe0] sm:$0xff]
    %v219 = vld [vmem:[%s5 + $0xe8] sm:$0xff]
    %v220 = vld [vmem:[%s5 + $0xf0] sm:$0xff]
    %v221 = vld [vmem:[%s5 + $0xf8] sm:$0xff]
    %v222 = vld [vmem:[%s5 + $0x100] sm:$0xff]
    %v223 = vld [vmem:[%s5 + $0x108] sm:$0xff]
    %v224 = vld [vmem:[%s5 + $0x110] sm:$0xff]
    %v225 = vld [vmem:[%s5 + $0x118] sm:$0xff]
    %v226 = vld [vmem:[%s5 + $0x120] sm:$0xff]
    %v227 = vld [vmem:[%s5 + $0x128] sm:$0xff]
    %v228 = vld [vmem:[%s5 + $0x130] sm:$0xff]
    %v229 = vld [vmem:[%s5 + $0x138] sm:$0xff]
    %v230 = vld [vmem:[%s5 + $0x140] sm:$0xff]
    %v231 = vld [vmem:[%s5 + $0x148] sm:$0xff]
    %v232 = vld [vmem:[%s5 + $0x150] sm:$0xff]
    %v233 = vld [vmem:[%s5 + $0x158] sm:$0xff]
    %v234 = vld [vmem:[%s5 + $0x160] sm:$0xff]
    %v235 = vld [vmem:[%s5 + $0x168] sm:$0xff]
    %v236 = vld [vmem:[%s5 + $0x170] sm:$0xff]
    %v237 = vld [vmem:[%s5 + $0x178] sm:$0xff]
    %v238 = vmul.f32 %v190, %v142
    %v239 = vmul.f32 %v191, %v143
    %v240 = vmul.f32 %v192, %v144
    %v241 = vmul.f32 %v193, %v145
    %v242 = vmul.f32 %v194, %v146
    %v243 = vmul.f32 %v195, %v147
    %v244 = vmul.f32 %v196, %v148
    %v245 = vmul.f32 %v197, %v149
    %v246 = vmul.f32 %v198, %v150
    %v247 = vmul.f32 %v199, %v151
    %v248 = vmul.f32 %v200, %v152
    %v249 = vmul.f32 %v201, %v153
    %v250 = vmul.f32 %v202, %v154
    %v251 = vmul.f32 %v203, %v155
    %v252 = vmul.f32 %v204, %v156
    %v253 = vmul.f32 %v205, %v157
    %v254 = vmul.f32 %v206, %v158
    %v255 = vmul.f32 %v207, %v159
    %v256 = vmul.f32 %v208, %v160
    %v257 = vmul.f32 %v209, %v161
    %v258 = vmul.f32 %v210, %v162
    %v259 = vmul.f32 %v211, %v163
    %v260 = vmul.f32 %v212, %v164
    %v261 = vmul.f32 %v213, %v165
    %v262 = vmul.f32 %v214, %v166
    %v263 = vmul.f32 %v215, %v167
    %v264 = vmul.f32 %v216, %v168
    %v265 = vmul.f32 %v217, %v169
    %v266 = vmul.f32 %v218, %v170
    %v267 = vmul.f32 %v219, %v171
    %v268 = vmul.f32 %v220, %v172
    %v269 = vmul.f32 %v221, %v173
    %v270 = vmul.f32 %v222, %v174
    %v271 = vmul.f32 %v223, %v175
    %v272 = vmul.f32 %v224, %v176
    %v273 = vmul.f32 %v225, %v177
    %v274 = vmul.f32 %v226, %v178
    %v275 = vmul.f32 %v227, %v179
    %v276 = vmul.f32 %v228, %v180
    %v277 = vmul.f32 %v229, %v181
    %v278 = vmul.f32 %v230, %v182
    %v279 = vmul.f32 %v231, %v183
    %v280 = vmul.f32 %v232, %v184
    %v281 = vmul.f32 %v233, %v185
    %v282 = vmul.f32 %v234, %v186
    %v283 = vmul.f32 %v235, %v187
    %v284 = vmul.f32 %v236, %v188
    %v285 = vmul.f32 %v237, %v189
    %v286 = vadd.f32 %v238, %v239
    %v287 = vadd.f32 %v286, %v240
    %v288 = vadd.f32 %v287, %v241
    %v289 = vadd.f32 %v288, %v242
    %v290 = vadd.f32 %v289, %v243
    %291 = vadd.xlane.f32.xlu0 %v290
    %v292 = vpop.xlane.xlu0 %291
    %v293 = vadd.f32 %v244, %v245
    %v294 = vadd.f32 %v293, %v246
    %v295 = vadd.f32 %v294, %v247
    %v296 = vadd.f32 %v295, %v248
    %v297 = vadd.f32 %v296, %v249
    %298 = vadd.xlane.f32.xlu0 %v297
    %v299 = vpop.xlane.xlu0 %298
    %v300 = vadd.f32 %v250, %v251
    %v301 = vadd.f32 %v300, %v252
    %v302 = vadd.f32 %v301, %v253
    %v303 = vadd.f32 %v302, %v254
    %v304 = vadd.f32 %v303, %v255
    %305 = vadd.xlane.f32.xlu0 %v304
    %v306 = vpop.xlane.xlu0 %305
    %v307 = vadd.f32 %v256, %v257
    %v308 = vadd.f32 %v307, %v258
    %v309 = vadd.f32 %v308, %v259
    %v310 = vadd.f32 %v309, %v260
    %v311 = vadd.f32 %v310, %v261
    %312 = vadd.xlane.f32.xlu0 %v311
    %v313 = vpop.xlane.xlu0 %312
    %v314 = vadd.f32 %v262, %v263
    %v315 = vadd.f32 %v314, %v264
    %v316 = vadd.f32 %v315, %v265
    %v317 = vadd.f32 %v316, %v266
    %v318 = vadd.f32 %v317, %v267
    %319 = vadd.xlane.f32.xlu0 %v318
    %v320 = vpop.xlane.xlu0 %319
    %v321 = vadd.f32 %v268, %v269
    %v322 = vadd.f32 %v321, %v270
    %v323 = vadd.f32 %v322, %v271
    %v324 = vadd.f32 %v323, %v272
    %v325 = vadd.f32 %v324, %v273
    %326 = vadd.xlane.f32.xlu0 %v325
    %v327 = vpop.xlane.xlu0 %326
    %v328 = vadd.f32 %v274, %v275
    %v329 = vadd.f32 %v328, %v276
    %v330 = vadd.f32 %v329, %v277
    %v331 = vadd.f32 %v330, %v278
    %v332 = vadd.f32 %v331, %v279
    %333 = vadd.xlane.f32.xlu0 %v332
    %v334 = vpop.xlane.xlu0 %333
    %v335 = vadd.f32 %v280, %v281
    %v336 = vadd.f32 %v335, %v282
    %v337 = vadd.f32 %v336, %v283
    %v338 = vadd.f32 %v337, %v284
    %v339 = vadd.f32 %v338, %v285
    %340 = vadd.xlane.f32.xlu0 %v339
    %v341 = vpop.xlane.xlu0 %340
    %v342 = vlaneseq
    %v343 = vshrl.u32 %v342, 7
    %v344 = vadd.s32 %v343, 8
    %v345 = vadd.s32 %v343, 16
    %v346 = vadd.s32 %v343, 24
    %v347 = vadd.s32 %v343, 32
    %v348 = vadd.s32 %v343, 40
    %v349 = vadd.s32 %v343, 48
    %v350 = vadd.s32 %v343, 56
    %v351 = vlaneseq
    %v352 = vand.u32 %v351, 127
    %vm353 = vcmp.eq.s32.totalorder %v343, %v352
    %vm354 = vcmp.eq.s32.totalorder %v344, %v352
    %vm355 = vcmp.eq.s32.totalorder %v345, %v352
    %vm356 = vcmp.eq.s32.totalorder %v346, %v352
    %vm357 = vcmp.eq.s32.totalorder %v347, %v352
    %vm358 = vcmp.eq.s32.totalorder %v348, %v352
    %vm359 = vcmp.eq.s32.totalorder %v349, %v352
    %vm360 = vcmp.eq.s32.totalorder %v350, %v352
    %v361 = vsel %vm353, %v292, 0.0
    %v362 = vsel %vm354, %v299, 0.0
    %v363 = vsel %vm355, %v306, 0.0
    %v364 = vsel %vm356, %v313, 0.0
    %v365 = vsel %vm357, %v320, 0.0
    %v366 = vsel %vm358, %v327, 0.0
    %v367 = vsel %vm359, %v334, 0.0
    %v368 = vsel %vm360, %v341, 0.0
    %v369 = vadd.f32 %v361, %v362
    %v370 = vadd.f32 %v369, %v363
    %v371 = vadd.f32 %v370, %v364
    %v372 = vadd.f32 %v371, %v365
    %v373 = vadd.f32 %v372, %v366
    %v374 = vadd.f32 %v373, %v367
    %v375 = vadd.f32 %v374, %v368
    %v376 = vrot.slane %v375, 4
    %v377 = vadd.f32 %v375, %v376
    %v378 = vrot.slane %v377, 2
    %v379 = vadd.f32 %v377, %v378
    %v380 = vrot.slane %v379, 1
    %v381 = vadd.f32 %v379, %v380
    %v382 = vld [vmem:[%s0] sm:$0x1]
    %v383 = vlaneseq
    %v384 = vshrl.u32 %v383, 7
    %v385 = vsub.s32 0, %v384
    %v386 = vrot.slane %v382, %v385
    %vm387 = vcmp.eq.s32.totalorder %v343, %v386
    %vm388 = vcmp.eq.s32.totalorder %v344, %v386
    %vm389 = vcmp.ge.s32.totalorder %v382, 0
    %vm390 = vcmp.lt.s32.totalorder %v382, 16
    %vm391 = vmand %vm389, %vm390
    %v392 = vsel %vm387, %v381, -1e+30
    %v393 = vsel %vm388, %v381, -1e+30
    %394 = vmax.xlane.f32.xlu0 %v392
    %v395 = vpop.xlane.xlu0 %394
    %396 = vmax.xlane.f32.xlu0 %v393
    %v397 = vpop.xlane.xlu0 %396
    %v398 = vsel %vm387, %v395, 0.0
    %v399 = vsel %vm388, %v397, 0.0
    %v400 = vadd.f32 %v398, %v399
    %v401 = vrot.slane %v400, 4
    %v402 = vadd.f32 %v400, %v401
    %v403 = vrot.slane %v402, 2
    %v404 = vadd.f32 %v402, %v403
    %v405 = vrot.slane %v404, 1
    %v406 = vadd.f32 %v404, %v405
    %v407 = vsub.f32 %v381, %v406
    %v408 = vmul.f32 %v407, 1.442695
    %v409 = vpow.pop %v408
    %v410 = vsel %vm387, %v409, 0.0
    %v411 = vsel %vm388, %v409, 0.0
    %412 = vadd.xlane.f32.xlu0 %v410
    %v413 = vpop.xlane.xlu0 %412
    %414 = vadd.xlane.f32.xlu0 %v411
    %v415 = vpop.xlane.xlu0 %414
    %v416 = vsel %vm387, %v413, 0.0
    %v417 = vsel %vm388, %v415, 0.0
    %v418 = vadd.f32 %v416, %v417
    %v419 = vrot.slane %v418, 4
    %v420 = vadd.f32 %v418, %v419
    %v421 = vrot.slane %v420, 2
    %v422 = vadd.f32 %v420, %v421
    %v423 = vrot.slane %v422, 1
    %v424 = vadd.f32 %v422, %v423
    %v425 = vsel %vm391, %v424, 1.0
    %v426 = vrcp.pop %v425
    %v427 = vmul.f32 %v409, %v426
    %v428 = vsel %vm391, %v427, 0.0
    %429 = vst [vmem:[%s12] sm:$0x1] %v428
    %v430 = vld [vmem:[%s1] sm:$0x1]
    %vm431 = vcmp.gt.f32.partialorder %v428, %v430
    %v432 = vsel %vm431, 1, 0
    %433 = vst [vmem:[%s14] sm:$0x1] %v432
    %v435 = vlaneseq
    %v436 = vshrl.u32 %v435, 7
    %v437 = vsub.s32 0, %v436
    %v438 = vrot.slane %v428, %v437
    %v440 = vsel %vm353, %v438, 0.0
    %v441 = vsel %vm354, %v438, 0.0
    %v442 = vsel %vm355, %v438, 0.0
    %v443 = vsel %vm356, %v438, 0.0
    %v444 = vsel %vm357, %v438, 0.0
    %v445 = vsel %vm358, %v438, 0.0
    %v446 = vsel %vm359, %v438, 0.0
    %v447 = vsel %vm360, %v438, 0.0
    %448 = vadd.xlane.f32.xlu0 %v440
    %v449 = vpop.xlane.xlu0 %448
    %450 = vadd.xlane.f32.xlu0 %v441
    %v451 = vpop.xlane.xlu0 %450
    %452 = vadd.xlane.f32.xlu0 %v442
    %v453 = vpop.xlane.xlu0 %452
    %454 = vadd.xlane.f32.xlu0 %v443
    %v455 = vpop.xlane.xlu0 %454
    %456 = vadd.xlane.f32.xlu0 %v444
    %v457 = vpop.xlane.xlu0 %456
    %458 = vadd.xlane.f32.xlu0 %v445
    %v459 = vpop.xlane.xlu0 %458
    %460 = vadd.xlane.f32.xlu0 %v446
    %v461 = vpop.xlane.xlu0 %460
    %462 = vadd.xlane.f32.xlu0 %v447
    %v463 = vpop.xlane.xlu0 %462
    %v464 = vsel %vm387, 1, 0
    %v465 = vsel %vm388, 1, 0
    %v466 = vcvt.s32.f32 %v464
    %v467 = vcvt.s32.f32 %v465
    %v468 = vmul.f32 %v449, %v142
    %v469 = vmul.f32 %v449, %v143
    %v470 = vmul.f32 %v449, %v144
    %v471 = vmul.f32 %v449, %v145
    %v472 = vmul.f32 %v449, %v146
    %v473 = vmul.f32 %v449, %v147
    %v474 = vmul.f32 %v451, %v148
    %v475 = vmul.f32 %v451, %v149
    %v476 = vmul.f32 %v451, %v150
    %v477 = vmul.f32 %v451, %v151
    %v478 = vmul.f32 %v451, %v152
    %v479 = vmul.f32 %v451, %v153
    %v480 = vmul.f32 %v453, %v154
    %v481 = vmul.f32 %v453, %v155
    %v482 = vmul.f32 %v453, %v156
    %v483 = vmul.f32 %v453, %v157
    %v484 = vmul.f32 %v453, %v158
    %v485 = vmul.f32 %v453, %v159
    %v486 = vmul.f32 %v455, %v160
    %v487 = vmul.f32 %v455, %v161
    %v488 = vmul.f32 %v455, %v162
    %v489 = vmul.f32 %v455, %v163
    %v490 = vmul.f32 %v455, %v164
    %v491 = vmul.f32 %v455, %v165
    %v492 = vmul.f32 %v457, %v166
    %v493 = vmul.f32 %v457, %v167
    %v494 = vmul.f32 %v457, %v168
    %v495 = vmul.f32 %v457, %v169
    %v496 = vmul.f32 %v457, %v170
    %v497 = vmul.f32 %v457, %v171
    %v498 = vmul.f32 %v459, %v172
    %v499 = vmul.f32 %v459, %v173
    %v500 = vmul.f32 %v459, %v174
    %v501 = vmul.f32 %v459, %v175
    %v502 = vmul.f32 %v459, %v176
    %v503 = vmul.f32 %v459, %v177
    %v504 = vmul.f32 %v461, %v178
    %v505 = vmul.f32 %v461, %v179
    %v506 = vmul.f32 %v461, %v180
    %v507 = vmul.f32 %v461, %v181
    %v508 = vmul.f32 %v461, %v182
    %v509 = vmul.f32 %v461, %v183
    %v510 = vmul.f32 %v463, %v184
    %v511 = vmul.f32 %v463, %v185
    %v512 = vmul.f32 %v463, %v186
    %v513 = vmul.f32 %v463, %v187
    %v514 = vmul.f32 %v463, %v188
    %v515 = vmul.f32 %v463, %v189
    %vm516 = vcmask 523264
    %v518 = vsel %vm516, %v466, 0
    %v521 = vsel %vm516, %v467, 0
    %523 = vmatprep.subr.mxu0 %v469
    %524 = vmatpush1.msra.mxu0 %v468
    %525 = vmatprep.subr.mxu0 %v475
    %526 = vmatpush1.msra.mxu0 %v474
    %527 = vmatprep.subr.mxu0 %v481
    %528 = vmatpush1.msra.mxu0 %v480
    %529 = vmatprep.subr.mxu0 %v487
    %530 = vmatpush1.msra.mxu0 %v486
    %531 = vmatprep.subr.mxu0 %v493
    %532 = vmatpush1.msra.mxu0 %v492
    %533 = vmatprep.subr.mxu0 %v499
    %534 = vmatpush1.msra.mxu0 %v498
    %535 = vmatprep.subr.mxu0 %v505
    %536 = vmatpush1.msra.mxu0 %v504
    %537 = vmatprep.subr.mxu0 %v511
    %538 = vmatpush1.msra.mxu0 %v510
    %539 = vmatprep.subr.mxu0 0.0
    %540 = vmatpush1.msra.mxu0 0.0
    %541 = vmatprep.subr.mxu0 0.0
    %542 = vmatpush1.msra.mxu0 0.0
    %543 = vmatprep.subr.mxu0 0.0
    %544 = vmatpush1.msra.mxu0 0.0
    %545 = vmatprep.subr.mxu0 0.0
    %546 = vmatpush1.msra.mxu0 0.0
    %547 = vmatprep.subr.mxu0 0.0
    %548 = vmatpush1.msra.mxu0 0.0
    %549 = vmatprep.subr.mxu0 0.0
    %550 = vmatpush1.msra.mxu0 0.0
    %551 = vmatprep.subr.mxu0 0.0
    %552 = vmatpush1.msra.mxu0 0.0
    %553 = vmatprep.subr.mxu0 0.0
    %554 = vmatpush1.msra.mxu0 0.0
    %555 = vmatprep.subr.mxu0 0.0
    %556 = vmatpush1.msra.mxu0 0.0
    %557 = vmatprep.subr.mxu0 0.0
    %558 = vmatpush1.msra.mxu0 0.0
    %559 = vmatprep.subr.mxu0 0.0
    %560 = vmatpush1.msra.mxu0 0.0
    %561 = vmatprep.subr.mxu0 0.0
    %562 = vmatpush1.msra.mxu0 0.0
    %563 = vmatprep.subr.mxu0 0.0
    %564 = vmatpush1.msra.mxu0 0.0
    %565 = vmatprep.subr.mxu0 0.0
    %566 = vmatpush1.msra.mxu0 0.0
    %567 = vmatprep.subr.mxu0 0.0
    %568 = vmatpush1.msra.mxu0 0.0
    %569 = vmatprep.subr.mxu0 0.0
    %570 = vmatpush1.msra.mxu0 0.0
    %571 = vmatprep.subr.mxu0 0.0
    %572 = vmatpush1.msra.mxu0 0.0
    %573 = vmatprep.subr.mxu0 0.0
    %574 = vmatpush1.msra.mxu0 0.0
    %575 = vmatprep.subr.mxu0 0.0
    %576 = vmatpush1.msra.mxu0 0.0
    %577 = vmatprep.subr.mxu0 0.0
    %578 = vmatpush1.msra.mxu0 0.0
    %579 = vmatprep.subr.mxu0 0.0
    %580 = vmatpush1.msra.mxu0 0.0
    %581 = vmatprep.subr.mxu0 0.0
    %582 = vmatpush1.msra.mxu0 0.0
    %583 = vmatprep.subr.mxu0 0.0
    %584 = vmatpush1.msra.mxu0 0.0
    %585 = vmatprep.subr.mxu0 0.0
    %586 = vmatpush1.msra.mxu0 0.0
    %587 = vmatprep.mubr.f32.mxu0 0.0
    %588 = vmatmul.mubr.f32.gmra.mrb[0].mxu0 %v518
    %v589 = vpop.f32.mrb[0].mxu0
    %v590 = vadd.f32 0.0, %v589
    %v591 = vpop.f32.mrb[0].mxu0
    %v592 = vadd.f32 0.0, %v591
    %593 = vmatprep.mubr.f32.mxu0 0.0
    %594 = vmatmul.mubr.f32.gmra.mrb[0].mxu0 %v521
    %v595 = vpop.f32.mrb[0].mxu0
    %v596 = vadd.f32 0.0, %v595
    %v597 = vpop.f32.mrb[0].mxu0
    %v598 = vadd.f32 0.0, %v597
    %599 = vdwg.mxu0
    %600 = vmatprep.subr.mxu0 %v471
    %601 = vmatpush1.msra.mxu0 %v470
    %602 = vmatprep.subr.mxu0 %v477
    %603 = vmatpush1.msra.mxu0 %v476
    %604 = vmatprep.subr.mxu0 %v483
    %605 = vmatpush1.msra.mxu0 %v482
    %606 = vmatprep.subr.mxu0 %v489
    %607 = vmatpush1.msra.mxu0 %v488
    %608 = vmatprep.subr.mxu0 %v495
    %609 = vmatpush1.msra.mxu0 %v494
    %610 = vmatprep.subr.mxu0 %v501
    %611 = vmatpush1.msra.mxu0 %v500
    %612 = vmatprep.subr.mxu0 %v507
    %613 = vmatpush1.msra.mxu0 %v506
    %614 = vmatprep.subr.mxu0 %v513
    %615 = vmatpush1.msra.mxu0 %v512
    %616 = vmatprep.subr.mxu0 0.0
    %617 = vmatpush1.msra.mxu0 0.0
    %618 = vmatprep.subr.mxu0 0.0
    %619 = vmatpush1.msra.mxu0 0.0
    %620 = vmatprep.subr.mxu0 0.0
    %621 = vmatpush1.msra.mxu0 0.0
    %622 = vmatprep.subr.mxu0 0.0
    %623 = vmatpush1.msra.mxu0 0.0
    %624 = vmatprep.subr.mxu0 0.0
    %625 = vmatpush1.msra.mxu0 0.0
    %626 = vmatprep.subr.mxu0 0.0
    %627 = vmatpush1.msra.mxu0 0.0
    %628 = vmatprep.subr.mxu0 0.0
    %629 = vmatpush1.msra.mxu0 0.0
    %630 = vmatprep.subr.mxu0 0.0
    %631 = vmatpush1.msra.mxu0 0.0
    %632 = vmatprep.subr.mxu0 0.0
    %633 = vmatpush1.msra.mxu0 0.0
    %634 = vmatprep.subr.mxu0 0.0
    %635 = vmatpush1.msra.mxu0 0.0
    %636 = vmatprep.subr.mxu0 0.0
    %637 = vmatpush1.msra.mxu0 0.0
    %638 = vmatprep.subr.mxu0 0.0
    %639 = vmatpush1.msra.mxu0 0.0
    %640 = vmatprep.subr.mxu0 0.0
    %641 = vmatpush1.msra.mxu0 0.0
    %642 = vmatprep.subr.mxu0 0.0
    %643 = vmatpush1.msra.mxu0 0.0
    %644 = vmatprep.subr.mxu0 0.0
    %645 = vmatpush1.msra.mxu0 0.0
    %646 = vmatprep.subr.mxu0 0.0
    %647 = vmatpush1.msra.mxu0 0.0
    %648 = vmatprep.subr.mxu0 0.0
    %649 = vmatpush1.msra.mxu0 0.0
    %650 = vmatprep.subr.mxu0 0.0
    %651 = vmatpush1.msra.mxu0 0.0
    %652 = vmatprep.subr.mxu0 0.0
    %653 = vmatpush1.msra.mxu0 0.0
    %654 = vmatprep.subr.mxu0 0.0
    %655 = vmatpush1.msra.mxu0 0.0
    %656 = vmatprep.subr.mxu0 0.0
    %657 = vmatpush1.msra.mxu0 0.0
    %658 = vmatprep.subr.mxu0 0.0
    %659 = vmatpush1.msra.mxu0 0.0
    %660 = vmatprep.subr.mxu0 0.0
    %661 = vmatpush1.msra.mxu0 0.0
    %662 = vmatprep.subr.mxu0 0.0
    %663 = vmatpush1.msra.mxu0 0.0
    %664 = vmatprep.mubr.f32.mxu0 0.0
    %665 = vmatmul.mubr.f32.gmra.mrb[0].mxu0 %v518
    %v666 = vpop.f32.mrb[0].mxu0
    %v667 = vadd.f32 0.0, %v666
    %v668 = vpop.f32.mrb[0].mxu0
    %v669 = vadd.f32 0.0, %v668
    %670 = vmatprep.mubr.f32.mxu0 0.0
    %671 = vmatmul.mubr.f32.gmra.mrb[0].mxu0 %v521
    %v672 = vpop.f32.mrb[0].mxu0
    %v673 = vadd.f32 0.0, %v672
    %v674 = vpop.f32.mrb[0].mxu0
    %v675 = vadd.f32 0.0, %v674
    %676 = vdwg.mxu0
    %677 = vmatprep.subr.mxu0 %v473
    %678 = vmatpush1.msra.mxu0 %v472
    %679 = vmatprep.subr.mxu0 %v479
    %680 = vmatpush1.msra.mxu0 %v478
    %681 = vmatprep.subr.mxu0 %v485
    %682 = vmatpush1.msra.mxu0 %v484
    %683 = vmatprep.subr.mxu0 %v491
    %684 = vmatpush1.msra.mxu0 %v490
    %685 = vmatprep.subr.mxu0 %v497
    %686 = vmatpush1.msra.mxu0 %v496
    %687 = vmatprep.subr.mxu0 %v503
    %688 = vmatpush1.msra.mxu0 %v502
    %689 = vmatprep.subr.mxu0 %v509
    %690 = vmatpush1.msra.mxu0 %v508
    %691 = vmatprep.subr.mxu0 %v515
    %692 = vmatpush1.msra.mxu0 %v514
    %693 = vmatprep.subr.mxu0 0.0
    %694 = vmatpush1.msra.mxu0 0.0
    %695 = vmatprep.subr.mxu0 0.0
    %696 = vmatpush1.msra.mxu0 0.0
    %697 = vmatprep.subr.mxu0 0.0
    %698 = vmatpush1.msra.mxu0 0.0
    %699 = vmatprep.subr.mxu0 0.0
    %700 = vmatpush1.msra.mxu0 0.0
    %701 = vmatprep.subr.mxu0 0.0
    %702 = vmatpush1.msra.mxu0 0.0
    %703 = vmatprep.subr.mxu0 0.0
    %704 = vmatpush1.msra.mxu0 0.0
    %705 = vmatprep.subr.mxu0 0.0
    %706 = vmatpush1.msra.mxu0 0.0
    %707 = vmatprep.subr.mxu0 0.0
    %708 = vmatpush1.msra.mxu0 0.0
    %709 = vmatprep.subr.mxu0 0.0
    %710 = vmatpush1.msra.mxu0 0.0
    %711 = vmatprep.subr.mxu0 0.0
    %712 = vmatpush1.msra.mxu0 0.0
    %713 = vmatprep.subr.mxu0 0.0
    %714 = vmatpush1.msra.mxu0 0.0
    %715 = vmatprep.subr.mxu0 0.0
    %716 = vmatpush1.msra.mxu0 0.0
    %717 = vmatprep.subr.mxu0 0.0
    %718 = vmatpush1.msra.mxu0 0.0
    %719 = vmatprep.subr.mxu0 0.0
    %720 = vmatpush1.msra.mxu0 0.0
    %721 = vmatprep.subr.mxu0 0.0
    %722 = vmatpush1.msra.mxu0 0.0
    %723 = vmatprep.subr.mxu0 0.0
    %724 = vmatpush1.msra.mxu0 0.0
    %725 = vmatprep.subr.mxu0 0.0
    %726 = vmatpush1.msra.mxu0 0.0
    %727 = vmatprep.subr.mxu0 0.0
    %728 = vmatpush1.msra.mxu0 0.0
    %729 = vmatprep.subr.mxu0 0.0
    %730 = vmatpush1.msra.mxu0 0.0
    %731 = vmatprep.subr.mxu0 0.0
    %732 = vmatpush1.msra.mxu0 0.0
    %733 = vmatprep.subr.mxu0 0.0
    %734 = vmatpush1.msra.mxu0 0.0
    %735 = vmatprep.subr.mxu0 0.0
    %736 = vmatpush1.msra.mxu0 0.0
    %737 = vmatprep.subr.mxu0 0.0
    %738 = vmatpush1.msra.mxu0 0.0
    %739 = vmatprep.subr.mxu0 0.0
    %740 = vmatpush1.msra.mxu0 0.0
    %741 = vmatprep.mubr.f32.mxu0 0.0
    %742 = vmatmul.mubr.f32.gmra.mrb[0].mxu0 %v518
    %v743 = vpop.f32.mrb[0].mxu0
    %v744 = vadd.f32 0.0, %v743
    %v745 = vpop.f32.mrb[0].mxu0
    %v746 = vadd.f32 0.0, %v745
    %747 = vmatprep.mubr.f32.mxu0 0.0
    %748 = vmatmul.mubr.f32.gmra.mrb[0].mxu0 %v521
    %v749 = vpop.f32.mrb[0].mxu0
    %v750 = vadd.f32 0.0, %v749
    %v751 = vpop.f32.mrb[0].mxu0
    %v752 = vadd.f32 0.0, %v751
    %753 = vdwg.mxu0
    %754 = vst [vmem:[#allocation3] sm:$0xff] %v590
    %755 = vst [vmem:[#allocation3 + $0x8] sm:$0xff] %v592
    %756 = vst [vmem:[#allocation3 + $0x10] sm:$0xff] %v667
    %757 = vst [vmem:[#allocation3 + $0x18] sm:$0xff] %v669
    %758 = vst [vmem:[#allocation3 + $0x20] sm:$0xff] %v744
    %759 = vst [vmem:[#allocation3 + $0x28] sm:$0xff] %v746
    %760 = vst [vmem:[#allocation3 + $0x30] sm:$0xff] %v596
    %761 = vst [vmem:[#allocation3 + $0x38] sm:$0xff] %v598
    %762 = vst [vmem:[#allocation3 + $0x40] sm:$0xff] %v673
    %763 = vst [vmem:[#allocation3 + $0x48] sm:$0xff] %v675
    %764 = vst [vmem:[#allocation3 + $0x50] sm:$0xff] %v750
    %765 = vst [vmem:[#allocation3 + $0x58] sm:$0xff] %v752
    %v766 = vld [vmem:[%s9] sm:$0xff]
    %v767 = vld [vmem:[%s9 + $0x8] sm:$0xff]
    %v768 = vld [vmem:[%s9 + $0x10] sm:$0xff]
    %v769 = vld [vmem:[%s6] sm:$0xff]
    %v770 = vld [vmem:[%s6 + $0x8] sm:$0xff]
    %v771 = vld [vmem:[%s6 + $0x10] sm:$0xff]
    %v772 = vld [vmem:[%s6 + $0x18] sm:$0xff]
    %v773 = vld [vmem:[%s6 + $0x20] sm:$0xff]
    %v774 = vld [vmem:[%s6 + $0x28] sm:$0xff]
    %v775 = vld [vmem:[%s6 + $0x30] sm:$0xff]
    %v776 = vld [vmem:[%s6 + $0x38] sm:$0xff]
    %v777 = vld [vmem:[%s6 + $0x40] sm:$0xff]
    %v778 = vld [vmem:[%s6 + $0x48] sm:$0xff]
    %v779 = vld [vmem:[%s6 + $0x50] sm:$0xff]
    %v780 = vld [vmem:[%s6 + $0x58] sm:$0xff]
    %v781 = vpack.c.bf16 %v775, %v769
    %v782 = vpack.c.bf16 %v776, %v770
    %v783 = vpack.c.bf16 %v777, %v771
    %v784 = vpack.c.bf16 %v778, %v772
    %v785 = vpack.c.bf16 %v779, %v773
    %v786 = vpack.c.bf16 %v780, %v774
    %v787 = vunpack.c.l.bf16 %v781
    %v788 = vunpack.c.l.bf16 %v782
    %v789 = vunpack.c.l.bf16 %v783
    %v790 = vunpack.c.l.bf16 %v784
    %v791 = vunpack.c.l.bf16 %v785
    %v792 = vunpack.c.l.bf16 %v786
    %v793 = vunpack.c.h.bf16 %v781
    %v794 = vunpack.c.h.bf16 %v782
    %v795 = vunpack.c.h.bf16 %v783
    %v796 = vunpack.c.h.bf16 %v784
    %v797 = vunpack.c.h.bf16 %v785
    %v798 = vunpack.c.h.bf16 %v786
    %v802 = vlaneseq
    %v803 = vshrl.u32 %v802, 7
    %v804 = vsub.s32 0, %v803
    %v805 = vrot.slane %v766, %v804
    %v806 = vlaneseq
    %v807 = vshrl.u32 %v806, 7
    %v808 = vsub.s32 4, %v807
    %v809 = vrot.slane %v766, %v808
    %v810 = vlaneseq
    %v811 = vshrl.u32 %v810, 7
    %v812 = vsub.s32 0, %v811
    %v813 = vrot.slane %v767, %v812
    %v814 = vlaneseq
    %v815 = vshrl.u32 %v814, 7
    %v816 = vsub.s32 4, %v815
    %v817 = vrot.slane %v767, %v816
    %v818 = vlaneseq
    %v819 = vshrl.u32 %v818, 7
    %v820 = vsub.s32 0, %v819
    %v821 = vrot.slane %v768, %v820
    %v822 = vlaneseq
    %v823 = vshrl.u32 %v822, 7
    %v824 = vsub.s32 4, %v823
    %v825 = vrot.slane %v768, %v824
    %v832 = vpack.c.bf16 %v805, %v805
    %v833 = vpack.c.bf16 %v809, %v809
    %v834 = vpack.c.bf16 %v813, %v813
    %v835 = vpack.c.bf16 %v817, %v817
    %v836 = vpack.c.bf16 %v821, %v821
    %v837 = vpack.c.bf16 %v825, %v825
    %v838 = vunpack.c.l.bf16 %v832
    %v839 = vunpack.c.l.bf16 %v833
    %v840 = vunpack.c.l.bf16 %v834
    %v841 = vunpack.c.l.bf16 %v835
    %v842 = vunpack.c.l.bf16 %v836
    %v843 = vunpack.c.l.bf16 %v837
    %v844 = vlaneseq
    %v845 = vshrl.u32 %v844, 7
    %v846 = vsub.s32 0, %v845
    %v847 = vrot.slane %v838, %v846
    %v848 = vlaneseq
    %v849 = vshrl.u32 %v848, 7
    %v850 = vsub.s32 0, %v849
    %v851 = vrot.slane %v839, %v850
    %v852 = vlaneseq
    %v853 = vshrl.u32 %v852, 7
    %v854 = vsub.s32 0, %v853
    %v855 = vrot.slane %v840, %v854
    %v856 = vlaneseq
    %v857 = vshrl.u32 %v856, 7
    %v858 = vsub.s32 0, %v857
    %v859 = vrot.slane %v841, %v858
    %v860 = vlaneseq
    %v861 = vshrl.u32 %v860, 7
    %v862 = vsub.s32 0, %v861
    %v863 = vrot.slane %v842, %v862
    %v864 = vlaneseq
    %v865 = vshrl.u32 %v864, 7
    %v866 = vsub.s32 0, %v865
    %v867 = vrot.slane %v843, %v866
    %v868 = vmul.f32 %v787, %v847
    %v869 = vmul.f32 %v788, %v851
    %v870 = vmul.f32 %v789, %v855
    %v871 = vmul.f32 %v790, %v859
    %v872 = vmul.f32 %v791, %v863
    %v873 = vmul.f32 %v792, %v867
    %v874 = vmul.f32 %v793, %v847
    %v875 = vmul.f32 %v794, %v851
    %v876 = vmul.f32 %v795, %v855
    %v877 = vmul.f32 %v796, %v859
    %v878 = vmul.f32 %v797, %v863
    %v879 = vmul.f32 %v798, %v867
    %v880 = vadd.f32 %v868, %v869
    %v881 = vadd.f32 %v880, %v870
    %v882 = vadd.f32 %v881, %v871
    %v883 = vadd.f32 %v882, %v872
    %v884 = vadd.f32 %v883, %v873
    %885 = vadd.xlane.f32.xlu0 %v884
    %v886 = vpop.xlane.xlu0 %885
    %v887 = vadd.f32 %v874, %v875
    %v888 = vadd.f32 %v887, %v876
    %v889 = vadd.f32 %v888, %v877
    %v890 = vadd.f32 %v889, %v878
    %v891 = vadd.f32 %v890, %v879
    %892 = vadd.xlane.f32.xlu0 %v891
    %v893 = vpop.xlane.xlu0 %892
    %v894 = vld [vmem:[%s7] sm:$0xff]
    %v895 = vld [vmem:[%s7 + $0x8] sm:$0xff]
    %v896 = vld [vmem:[%s7 + $0x10] sm:$0xff]
    %v897 = vld [vmem:[%s7 + $0x18] sm:$0xff]
    %v898 = vld [vmem:[%s7 + $0x20] sm:$0xff]
    %v899 = vld [vmem:[%s7 + $0x28] sm:$0xff]
    %v900 = vld [vmem:[%s7 + $0x30] sm:$0xff]
    %v901 = vld [vmem:[%s7 + $0x38] sm:$0xff]
    %v902 = vld [vmem:[%s7 + $0x40] sm:$0xff]
    %v903 = vld [vmem:[%s7 + $0x48] sm:$0xff]
    %v904 = vld [vmem:[%s7 + $0x50] sm:$0xff]
    %v905 = vld [vmem:[%s7 + $0x58] sm:$0xff]
    %v906 = vpack.c.bf16 %v900, %v894
    %v907 = vpack.c.bf16 %v901, %v895
    %v908 = vpack.c.bf16 %v902, %v896
    %v909 = vpack.c.bf16 %v903, %v897
    %v910 = vpack.c.bf16 %v904, %v898
    %v911 = vpack.c.bf16 %v905, %v899
    %v912 = vunpack.c.l.bf16 %v906
    %v913 = vunpack.c.l.bf16 %v907
    %v914 = vunpack.c.l.bf16 %v908
    %v915 = vunpack.c.l.bf16 %v909
    %v916 = vunpack.c.l.bf16 %v910
    %v917 = vunpack.c.l.bf16 %v911
    %v918 = vunpack.c.h.bf16 %v906
    %v919 = vunpack.c.h.bf16 %v907
    %v920 = vunpack.c.h.bf16 %v908
    %v921 = vunpack.c.h.bf16 %v909
    %v922 = vunpack.c.h.bf16 %v910
    %v923 = vunpack.c.h.bf16 %v911
    %v924 = vlaneseq
    %v925 = vshrl.u32 %v924, 7
    %v926 = vsub.s32 1, %v925
    %v927 = vrot.slane %v766, %v926
    %v928 = vlaneseq
    %v929 = vshrl.u32 %v928, 7
    %v930 = vsub.s32 5, %v929
    %v931 = vrot.slane %v766, %v930
    %v932 = vlaneseq
    %v933 = vshrl.u32 %v932, 7
    %v934 = vsub.s32 1, %v933
    %v935 = vrot.slane %v767, %v934
    %v936 = vlaneseq
    %v937 = vshrl.u32 %v936, 7
    %v938 = vsub.s32 5, %v937
    %v939 = vrot.slane %v767, %v938
    %v940 = vlaneseq
    %v941 = vshrl.u32 %v940, 7
    %v942 = vsub.s32 1, %v941
    %v943 = vrot.slane %v768, %v942
    %v944 = vlaneseq
    %v945 = vshrl.u32 %v944, 7
    %v946 = vsub.s32 5, %v945
    %v947 = vrot.slane %v768, %v946
    %v954 = vpack.c.bf16 %v927, %v927
    %v955 = vpack.c.bf16 %v931, %v931
    %v956 = vpack.c.bf16 %v935, %v935
    %v957 = vpack.c.bf16 %v939, %v939
    %v958 = vpack.c.bf16 %v943, %v943
    %v959 = vpack.c.bf16 %v947, %v947
    %v960 = vunpack.c.l.bf16 %v954
    %v961 = vunpack.c.l.bf16 %v955
    %v962 = vunpack.c.l.bf16 %v956
    %v963 = vunpack.c.l.bf16 %v957
    %v964 = vunpack.c.l.bf16 %v958
    %v965 = vunpack.c.l.bf16 %v959
    %v966 = vlaneseq
    %v967 = vshrl.u32 %v966, 7
    %v968 = vsub.s32 1, %v967
    %v969 = vrot.slane %v960, %v968
    %v970 = vlaneseq
    %v971 = vshrl.u32 %v970, 7
    %v972 = vsub.s32 1, %v971
    %v973 = vrot.slane %v961, %v972
    %v974 = vlaneseq
    %v975 = vshrl.u32 %v974, 7
    %v976 = vsub.s32 1, %v975
    %v977 = vrot.slane %v962, %v976
    %v978 = vlaneseq
    %v979 = vshrl.u32 %v978, 7
    %v980 = vsub.s32 1, %v979
    %v981 = vrot.slane %v963, %v980
    %v982 = vlaneseq
    %v983 = vshrl.u32 %v982, 7
    %v984 = vsub.s32 1, %v983
    %v985 = vrot.slane %v964, %v984
    %v986 = vlaneseq
    %v987 = vshrl.u32 %v986, 7
    %v988 = vsub.s32 1, %v987
    %v989 = vrot.slane %v965, %v988
    %v990 = vmul.f32 %v912, %v969
    %v991 = vmul.f32 %v913, %v973
    %v992 = vmul.f32 %v914, %v977
    %v993 = vmul.f32 %v915, %v981
    %v994 = vmul.f32 %v916, %v985
    %v995 = vmul.f32 %v917, %v989
    %v996 = vmul.f32 %v918, %v969
    %v997 = vmul.f32 %v919, %v973
    %v998 = vmul.f32 %v920, %v977
    %v999 = vmul.f32 %v921, %v981
    %v1000 = vmul.f32 %v922, %v985
    %v1001 = vmul.f32 %v923, %v989
    %v1002 = vadd.f32 %v990, %v991
    %v1003 = vadd.f32 %v1002, %v992
    %v1004 = vadd.f32 %v1003, %v993
    %v1005 = vadd.f32 %v1004, %v994
    %v1006 = vadd.f32 %v1005, %v995
    %1007 = vadd.xlane.f32.xlu0 %v1006
    %v1008 = vpop.xlane.xlu0 %1007
    %v1009 = vadd.f32 %v996, %v997
    %v1010 = vadd.f32 %v1009, %v998
    %v1011 = vadd.f32 %v1010, %v999
    %v1012 = vadd.f32 %v1011, %v1000
    %v1013 = vadd.f32 %v1012, %v1001
    %1014 = vadd.xlane.f32.xlu0 %v1013
    %v1015 = vpop.xlane.xlu0 %1014
    %v1016 = vadd.f32 %v886, %v1008
    %v1017 = vadd.f32 %v893, %v1015
    %v1018 = vpack.c.bf16 %v596, %v590
    %v1019 = vpack.c.bf16 %v598, %v592
    %v1020 = vpack.c.bf16 %v673, %v667
    %v1021 = vpack.c.bf16 %v675, %v669
    %v1022 = vpack.c.bf16 %v750, %v744
    %v1023 = vpack.c.bf16 %v752, %v746
    %v1024 = vunpack.c.l.bf16 %v1018
    %v1025 = vunpack.c.l.bf16 %v1019
    %v1026 = vunpack.c.l.bf16 %v1020
    %v1027 = vunpack.c.l.bf16 %v1021
    %v1028 = vunpack.c.l.bf16 %v1022
    %v1029 = vunpack.c.l.bf16 %v1023
    %v1030 = vunpack.c.h.bf16 %v1018
    %v1031 = vunpack.c.h.bf16 %v1019
    %v1032 = vunpack.c.h.bf16 %v1020
    %v1033 = vunpack.c.h.bf16 %v1021
    %v1034 = vunpack.c.h.bf16 %v1022
    %v1035 = vunpack.c.h.bf16 %v1023
    %v1036 = vlaneseq
    %v1037 = vshrl.u32 %v1036, 7
    %v1038 = vsub.s32 2, %v1037
    %v1039 = vrot.slane %v766, %v1038
    %v1040 = vlaneseq
    %v1041 = vshrl.u32 %v1040, 7
    %v1042 = vsub.s32 6, %v1041
    %v1043 = vrot.slane %v766, %v1042
    %v1044 = vlaneseq
    %v1045 = vshrl.u32 %v1044, 7
    %v1046 = vsub.s32 2, %v1045
    %v1047 = vrot.slane %v767, %v1046
    %v1048 = vlaneseq
    %v1049 = vshrl.u32 %v1048, 7
    %v1050 = vsub.s32 6, %v1049
    %v1051 = vrot.slane %v767, %v1050
    %v1052 = vlaneseq
    %v1053 = vshrl.u32 %v1052, 7
    %v1054 = vsub.s32 2, %v1053
    %v1055 = vrot.slane %v768, %v1054
    %v1056 = vlaneseq
    %v1057 = vshrl.u32 %v1056, 7
    %v1058 = vsub.s32 6, %v1057
    %v1059 = vrot.slane %v768, %v1058
    %v1066 = vpack.c.bf16 %v1039, %v1039
    %v1067 = vpack.c.bf16 %v1043, %v1043
    %v1068 = vpack.c.bf16 %v1047, %v1047
    %v1069 = vpack.c.bf16 %v1051, %v1051
    %v1070 = vpack.c.bf16 %v1055, %v1055
    %v1071 = vpack.c.bf16 %v1059, %v1059
    %v1072 = vunpack.c.l.bf16 %v1066
    %v1073 = vunpack.c.l.bf16 %v1067
    %v1074 = vunpack.c.l.bf16 %v1068
    %v1075 = vunpack.c.l.bf16 %v1069
    %v1076 = vunpack.c.l.bf16 %v1070
    %v1077 = vunpack.c.l.bf16 %v1071
    %v1078 = vlaneseq
    %v1079 = vshrl.u32 %v1078, 7
    %v1080 = vsub.s32 2, %v1079
    %v1081 = vrot.slane %v1072, %v1080
    %v1082 = vlaneseq
    %v1083 = vshrl.u32 %v1082, 7
    %v1084 = vsub.s32 2, %v1083
    %v1085 = vrot.slane %v1073, %v1084
    %v1086 = vlaneseq
    %v1087 = vshrl.u32 %v1086, 7
    %v1088 = vsub.s32 2, %v1087
    %v1089 = vrot.slane %v1074, %v1088
    %v1090 = vlaneseq
    %v1091 = vshrl.u32 %v1090, 7
    %v1092 = vsub.s32 2, %v1091
    %v1093 = vrot.slane %v1075, %v1092
    %v1094 = vlaneseq
    %v1095 = vshrl.u32 %v1094, 7
    %v1096 = vsub.s32 2, %v1095
    %v1097 = vrot.slane %v1076, %v1096
    %v1098 = vlaneseq
    %v1099 = vshrl.u32 %v1098, 7
    %v1100 = vsub.s32 2, %v1099
    %v1101 = vrot.slane %v1077, %v1100
    %v1102 = vmul.f32 %v1024, %v1081
    %v1103 = vmul.f32 %v1025, %v1085
    %v1104 = vmul.f32 %v1026, %v1089
    %v1105 = vmul.f32 %v1027, %v1093
    %v1106 = vmul.f32 %v1028, %v1097
    %v1107 = vmul.f32 %v1029, %v1101
    %v1108 = vmul.f32 %v1030, %v1081
    %v1109 = vmul.f32 %v1031, %v1085
    %v1110 = vmul.f32 %v1032, %v1089
    %v1111 = vmul.f32 %v1033, %v1093
    %v1112 = vmul.f32 %v1034, %v1097
    %v1113 = vmul.f32 %v1035, %v1101
    %v1114 = vadd.f32 %v1102, %v1103
    %v1115 = vadd.f32 %v1114, %v1104
    %v1116 = vadd.f32 %v1115, %v1105
    %v1117 = vadd.f32 %v1116, %v1106
    %v1118 = vadd.f32 %v1117, %v1107
    %1119 = vadd.xlane.f32.xlu0 %v1118
    %v1120 = vpop.xlane.xlu0 %1119
    %v1121 = vadd.f32 %v1108, %v1109
    %v1122 = vadd.f32 %v1121, %v1110
    %v1123 = vadd.f32 %v1122, %v1111
    %v1124 = vadd.f32 %v1123, %v1112
    %v1125 = vadd.f32 %v1124, %v1113
    %1126 = vadd.xlane.f32.xlu0 %v1125
    %v1127 = vpop.xlane.xlu0 %1126
    %v1128 = vadd.f32 %v1016, %v1120
    %v1129 = vadd.f32 %v1017, %v1127
    %v1130 = vld [vmem:[%s8] sm:$0xff]
    %v1131 = vld [vmem:[%s8 + $0x8] sm:$0xff]
    %v1132 = vld [vmem:[%s8 + $0x10] sm:$0xff]
    %v1133 = vld [vmem:[%s8 + $0x18] sm:$0xff]
    %v1134 = vld [vmem:[%s8 + $0x20] sm:$0xff]
    %v1135 = vld [vmem:[%s8 + $0x28] sm:$0xff]
    %v1136 = vld [vmem:[%s8 + $0x30] sm:$0xff]
    %v1137 = vld [vmem:[%s8 + $0x38] sm:$0xff]
    %v1138 = vld [vmem:[%s8 + $0x40] sm:$0xff]
    %v1139 = vld [vmem:[%s8 + $0x48] sm:$0xff]
    %v1140 = vld [vmem:[%s8 + $0x50] sm:$0xff]
    %v1141 = vld [vmem:[%s8 + $0x58] sm:$0xff]
    %v1142 = vpack.c.bf16 %v1136, %v1130
    %v1143 = vpack.c.bf16 %v1137, %v1131
    %v1144 = vpack.c.bf16 %v1138, %v1132
    %v1145 = vpack.c.bf16 %v1139, %v1133
    %v1146 = vpack.c.bf16 %v1140, %v1134
    %v1147 = vpack.c.bf16 %v1141, %v1135
    %v1148 = vunpack.c.l.bf16 %v1142
    %v1149 = vunpack.c.l.bf16 %v1143
    %v1150 = vunpack.c.l.bf16 %v1144
    %v1151 = vunpack.c.l.bf16 %v1145
    %v1152 = vunpack.c.l.bf16 %v1146
    %v1153 = vunpack.c.l.bf16 %v1147
    %v1154 = vunpack.c.h.bf16 %v1142
    %v1155 = vunpack.c.h.bf16 %v1143
    %v1156 = vunpack.c.h.bf16 %v1144
    %v1157 = vunpack.c.h.bf16 %v1145
    %v1158 = vunpack.c.h.bf16 %v1146
    %v1159 = vunpack.c.h.bf16 %v1147
    %v1160 = vlaneseq
    %v1161 = vshrl.u32 %v1160, 7
    %v1162 = vsub.s32 3, %v1161
    %v1163 = vrot.slane %v766, %v1162
    %v1164 = vlaneseq
    %v1165 = vshrl.u32 %v1164, 7
    %v1166 = vsub.s32 7, %v1165
    %v1167 = vrot.slane %v766, %v1166
    %v1168 = vlaneseq
    %v1169 = vshrl.u32 %v1168, 7
    %v1170 = vsub.s32 3, %v1169
    %v1171 = vrot.slane %v767, %v1170
    %v1172 = vlaneseq
    %v1173 = vshrl.u32 %v1172, 7
    %v1174 = vsub.s32 7, %v1173
    %v1175 = vrot.slane %v767, %v1174
    %v1176 = vlaneseq
    %v1177 = vshrl.u32 %v1176, 7
    %v1178 = vsub.s32 3, %v1177
    %v1179 = vrot.slane %v768, %v1178
    %v1180 = vlaneseq
    %v1181 = vshrl.u32 %v1180, 7
    %v1182 = vsub.s32 7, %v1181
    %v1183 = vrot.slane %v768, %v1182
    %v1190 = vpack.c.bf16 %v1163, %v1163
    %v1191 = vpack.c.bf16 %v1167, %v1167
    %v1192 = vpack.c.bf16 %v1171, %v1171
    %v1193 = vpack.c.bf16 %v1175, %v1175
    %v1194 = vpack.c.bf16 %v1179, %v1179
    %v1195 = vpack.c.bf16 %v1183, %v1183
    %v1196 = vunpack.c.l.bf16 %v1190
    %v1197 = vunpack.c.l.bf16 %v1191
    %v1198 = vunpack.c.l.bf16 %v1192
    %v1199 = vunpack.c.l.bf16 %v1193
    %v1200 = vunpack.c.l.bf16 %v1194
    %v1201 = vunpack.c.l.bf16 %v1195
    %v1202 = vlaneseq
    %v1203 = vshrl.u32 %v1202, 7
    %v1204 = vsub.s32 3, %v1203
    %v1205 = vrot.slane %v1196, %v1204
    %v1206 = vlaneseq
    %v1207 = vshrl.u32 %v1206, 7
    %v1208 = vsub.s32 3, %v1207
    %v1209 = vrot.slane %v1197, %v1208
    %v1210 = vlaneseq
    %v1211 = vshrl.u32 %v1210, 7
    %v1212 = vsub.s32 3, %v1211
    %v1213 = vrot.slane %v1198, %v1212
    %v1214 = vlaneseq
    %v1215 = vshrl.u32 %v1214, 7
    %v1216 = vsub.s32 3, %v1215
    %v1217 = vrot.slane %v1199, %v1216
    %v1218 = vlaneseq
    %v1219 = vshrl.u32 %v1218, 7
    %v1220 = vsub.s32 3, %v1219
    %v1221 = vrot.slane %v1200, %v1220
    %v1222 = vlaneseq
    %v1223 = vshrl.u32 %v1222, 7
    %v1224 = vsub.s32 3, %v1223
    %v1225 = vrot.slane %v1201, %v1224
    %v1226 = vmul.f32 %v1148, %v1205
    %v1227 = vmul.f32 %v1149, %v1209
    %v1228 = vmul.f32 %v1150, %v1213
    %v1229 = vmul.f32 %v1151, %v1217
    %v1230 = vmul.f32 %v1152, %v1221
    %v1231 = vmul.f32 %v1153, %v1225
    %v1232 = vmul.f32 %v1154, %v1205
    %v1233 = vmul.f32 %v1155, %v1209
    %v1234 = vmul.f32 %v1156, %v1213
    %v1235 = vmul.f32 %v1157, %v1217
    %v1236 = vmul.f32 %v1158, %v1221
    %v1237 = vmul.f32 %v1159, %v1225
    %v1238 = vadd.f32 %v1226, %v1227
    %v1239 = vadd.f32 %v1238, %v1228
    %v1240 = vadd.f32 %v1239, %v1229
    %v1241 = vadd.f32 %v1240, %v1230
    %v1242 = vadd.f32 %v1241, %v1231
    %1243 = vadd.xlane.f32.xlu0 %v1242
    %v1244 = vpop.xlane.xlu0 %1243
    %v1245 = vadd.f32 %v1232, %v1233
    %v1246 = vadd.f32 %v1245, %v1234
    %v1247 = vadd.f32 %v1246, %v1235
    %v1248 = vadd.f32 %v1247, %v1236
    %v1249 = vadd.f32 %v1248, %v1237
    %1250 = vadd.xlane.f32.xlu0 %v1249
    %v1251 = vpop.xlane.xlu0 %1250
    %v1252 = vadd.f32 %v1128, %v1244
    %v1253 = vadd.f32 %v1129, %v1251
    %v1254 = vsel %vm353, %v1252, 0.0
    %v1255 = vsel %vm354, %v1253, 0.0
    %v1256 = vadd.f32 %v1254, %v1255
    %v1257 = vrot.slane %v1256, 4
    %v1258 = vadd.f32 %v1256, %v1257
    %v1259 = vrot.slane %v1258, 2
    %v1260 = vadd.f32 %v1258, %v1259
    %v1261 = vrot.slane %v1260, 1
    %v1262 = vadd.f32 %v1260, %v1261
    %v1263 = vld [vmem:[#allocation2] sm:$0x1]
    %1265 = vset.pattern.permute.xlu0 0
    %1266 = vperm.xlu0 %1265, %v1263
    %v1267 = vpop.permute.xlu0 %1266
    %v1269 = vlaneseq
    %v1270 = vshrl.u32 %v1269, 7
    %v1271 = vsub.s32 0, %v1270
    %v1272 = vrot.slane %v1267, %v1271
    %v1273 = vadd.f32 %v1262, %v1272
    %1274 = vst [vmem:[%s13] sm:$0x1] %v1273
    %v1275 = vld [vmem:[%s2] sm:$0x1]
    %vm1276 = vcmp.gt.f32.partialorder %v1273, %v1275
    %v1277 = vsel %vm1276, 1, 0
    %1278 = vst [vmem:[%s15] sm:$0x1] %v1277
    // Predicated region
    $region46: #{retriever_forward.1} parent=1 // pred_check
      _
    $region47: #{retriever_forward.1} parent=1 // pred_check_branch
      %1280 = sbr.rel (0) target = $region49
    $region48: #{retriever_forward.1} parent=1 // pred_region
      %s1282 = ssub.s32 1536, 1536
      %1283 = vsyncadd [#allocation4], %s1282
      %s1284 = sshll.u32 [#allocation3], 4
      %s1285 = int_to_ptr.vmem [resolvable:$true] %s1284
      %1290 = dma.vmem_to_hbm [thread:$0]  %s1285, 1536, %s11, [#allocation4], 768, 768, 48
    $region49: #{retriever_forward.1} parent=1 // pred_fallthru
      _
    // Predicated region
    $region50: #{retriever_forward.1} parent=1 // pred_check
      _
    $region51: #{retriever_forward.1} parent=1 // pred_check_branch
      %1292 = sbr.rel (0) target = $region53
    $region52: #{retriever_forward.1} parent=1 // pred_region
      _
    $region53: #{retriever_forward.1} parent=1 // pred_fallthru
      _
    // Predicated region
    $region54: #{retriever_forward.1} parent=1 // pred_check
      _
    $region55: #{retriever_forward.1} parent=1 // pred_check_branch
      %1294 = sbr.rel (0) target = $region57
    $region56: #{retriever_forward.1} parent=1 // pred_region
      _
    $region57: #{retriever_forward.1} parent=1 // pred_fallthru
      _
    // Predicated region
    $region58: #{retriever_forward.1} parent=1 // pred_check
      _
    $region59: #{retriever_forward.1} parent=1 // pred_check_branch
      %1296 = sbr.rel (0) target = $region61
    $region60: #{retriever_forward.1} parent=1 // pred_region
      _
    $region61: #{retriever_forward.1} parent=1 // pred_fallthru
      _
    // Predicated region
    $region62: #{retriever_forward.1} parent=1 // pred_check
      _
    $region63: #{retriever_forward.1} parent=1 // pred_check_branch
      %1298 = sbr.rel (0) target = $region65
    $region64: #{retriever_forward.1} parent=1 // pred_region
      _
    $region65: #{retriever_forward.1} parent=1 // pred_fallthru
      _
    // Predicated region
    $region66: #{retriever_forward.1} parent=1 // pred_check
      _
    $region67: #{retriever_forward.1} parent=1 // pred_check_branch
      %1300 = sbr.rel (0) target = $region69
    $region68: #{retriever_forward.1} parent=1 // pred_region
      %1301 = dma.done [#allocation4], 1536
    $region69: #{retriever_forward.1} parent=1 // pred_fallthru
      _
    // Predicated region
    $region70: #{retriever_forward.1} parent=1 // pred_check
      _
    $region71: #{retriever_forward.1} parent=1 // pred_check_branch
      %1303 = sbr.rel (0) target = $region73
    $region72: #{retriever_forward.1} parent=1 // pred_region
      _
    $region73: #{retriever_forward.1} parent=1 // pred_fallthru
      _
    // Predicated region
    $region74: #{retriever_forward.1} parent=1 // pred_check
      _
    $region75: #{retriever_forward.1} parent=1 // pred_check_branch
      %1305 = sbr.rel (0) target = $region77
    $region76: #{retriever_forward.1} parent=1 // pred_region
      _
    $region77: #{retriever_forward.1} parent=1 // pred_fallthru
      _
    // Predicated region
    $region78: #{retriever_forward.1} parent=1 // pred_check
      _
    $region79: #{retriever_forward.1} parent=1 // pred_check_branch
      %1307 = sbr.rel (0) target = $region81
    $region80: #{retriever_forward.1} parent=1 // pred_region
      _
    $region81: #{retriever_forward.1} parent=1 // pred_fallthru
      _
    // Predicated region
    $region82: #{retriever_forward.1} parent=1 // pred_check
      _
    $region83: #{retriever_forward.1} parent=1 // pred_check_branch
      %1309 = sbr.rel (0) target = $region85
    $region84: #{retriever_forward.1} parent=1 // pred_region
      _
    $region85: #{retriever_forward.1} parent=1 // pred_fallthru
      _
    %1310 = vsyncpa [#allocation4], 1

</llo_original>
